<compile_context>
chip_gen: v6e
topology: v6e:2x2x1
jax: 0.10.0
libtpu: 0.0.40
codegen_flags: <defaults>
</compile_context>

<pallas_src>
import jax
import jax.numpy as jnp
from jax import lax
from jax.experimental import pallas as pl
from jax.experimental.pallas import tpu as pltpu

# ---- small synthetic XLM config ----
VOCAB = 100        # vocab size
N_LANGS = 4        # n_langs (lang embeddings)
MAX_POS = 64       # max position embeddings
D = 32             # emb_dim
H = 4              # n_heads
DH = D // H        # dim per head
FF = 4 * D         # ffn hidden dim
N_LAYERS = 2       # n_layers
LN_EPS = 1e-12     # layer_norm_eps
NEG_INF = -1e9


# ---------------- in-kernel helpers (f32 math, bf16 MXU inputs) ----------------
def _ln(x, g, b):
    mu = jnp.mean(x, axis=-1, keepdims=True)
    var = jnp.mean((x - mu) ** 2, axis=-1, keepdims=True)
    return (x - mu) * lax.rsqrt(var + LN_EPS) * g + b


def _mxu(a, w):
    # bf16 MXU inputs, f32 accumulation.
    return jnp.dot(a.astype(jnp.bfloat16), w.astype(jnp.bfloat16),
                   preferred_element_type=jnp.float32)


def _gelu(x):
    # TODO(synk): XLM/HF uses the exact erf-GELU; tanh approximation kept for robust Mosaic lowering.
    c = jnp.float32(0.7978845608028654)  # sqrt(2/pi)
    return 0.5 * x * (1.0 + jnp.tanh(c * (x + 0.044715 * x * x * x)))


# ---------------- single fused encoder kernel (grid over layers) ----------------
def _encoder_kernel(x_ref, bias_ref, mcol_ref, lng_ref, lnb_ref,
                    wqkv_ref, bqkv_ref, wo_ref, bo_ref,
                    ln1g_ref, ln1b_ref,
                    w1_ref, b1_ref, w2_ref, b2_ref,
                    ln2g_ref, ln2b_ref,
                    o_ref, acc_ref):
    lyr = pl.program_id(0)
    mcol = mcol_ref[...]                            # (BS, 1) padding mask column
    bias = bias_ref[...]                            # (BS, BS) additive attention bias
    scale = jnp.float32(1.0 / (DH ** 0.5))

    # ---- layer-0 prologue: embedding LayerNorm + padding-mask multiply ----
    @pl.when(lyr == 0)
    def _():
        x0 = x_ref[...].astype(jnp.float32)
        acc_ref[...] = _ln(x0, lng_ref[...], lnb_ref[...]) * mcol

    x = acc_ref[...]                                # (BS, D) f32 running hidden state

    # ---- fused QKV projection ----
    qkv = _mxu(x, wqkv_ref[0]) + bqkv_ref[0]        # (BS, 3D), f32
    qkv_bf = qkv.astype(jnp.bfloat16)               # cast once, slice per head
    wo = wo_ref[0]                                  # (D, D) bf16

    # ---- per-head attention; output projection folded into the head loop ----
    attn = None
    for h in range(H):
        qh = qkv_bf[:, h * DH:(h + 1) * DH]                       # (BS, DH)
        kh = qkv_bf[:, D + h * DH: D + (h + 1) * DH]              # (BS, DH)
        vh = qkv_bf[:, 2 * D + h * DH: 2 * D + (h + 1) * DH]      # (BS, DH)

        # scores = q @ k^T  (contract head dim)
        s = lax.dot_general(qh, kh, (((1,), (1,)), ((), ())),
                            preferred_element_type=jnp.float32)   # (BS, BS)
        s = s * scale + bias
        s = s - jnp.max(s, axis=-1, keepdims=True)
        p = jnp.exp(s)
        p = p * pl.reciprocal(jnp.sum(p, axis=-1, keepdims=True), approx=True)

        ctx_h = jnp.dot(p.astype(jnp.bfloat16), vh,
                        preferred_element_type=jnp.float32)        # (BS, DH)
        # fold this head's slice of the output projection
        part = _mxu(ctx_h, wo[h * DH:(h + 1) * DH, :])             # (BS, D)
        attn = part if attn is None else attn + part
    attn = attn + bo_ref[0]

    # ---- residual + post-LN (XLM order) ----
    x1 = _ln(x + attn, ln1g_ref[0], ln1b_ref[0])

    # ---- FFN: lin1 -> GELU -> lin2 (intermediate never leaves VMEM) ----
    ff = _gelu(_mxu(x1, w1_ref[0]) + b1_ref[0])
    ff = _mxu(ff, w2_ref[0]) + b2_ref[0]
    x2 = _ln(x1 + ff, ln2g_ref[0], ln2b_ref[0]) * mcol   # padding-mask fused in

    acc_ref[...] = x2
    o_ref[...] = x2.astype(o_ref.dtype)


# ---------------- Parameters ----------------
def init_params(key):
    W_DT = jnp.bfloat16  # matmul-weight storage (halves weight DMA, f32 accumulation)

    def nrm(k, shape, scale=0.02, dtype=jnp.float32):
        return (scale * jax.random.normal(k, shape)).astype(dtype)

    keys = iter(jax.random.split(key, 8 + N_LAYERS * 16))
    params = {
        'word_emb': nrm(next(keys), (VOCAB, D), D ** -0.5),
        'pos_emb':  nrm(next(keys), (MAX_POS, D), D ** -0.5),
        'lang_emb': nrm(next(keys), (N_LANGS, D), D ** -0.5),
        'ln_emb_g': jnp.ones((1, D), jnp.float32),
        'ln_emb_b': jnp.zeros((1, D), jnp.float32),
    }
    names = ('wqkv', 'bqkv', 'wo', 'bo', 'ln1_g', 'ln1_b',
             'w1', 'b1', 'w2', 'b2', 'ln2_g', 'ln2_b')
    stk = {n: [] for n in names}
    for _ in range(N_LAYERS):
        wq = nrm(next(keys), (D, D))
        wk = nrm(next(keys), (D, D))
        wv = nrm(next(keys), (D, D))
        stk['wqkv'].append(jnp.concatenate([wq, wk, wv], axis=1).astype(W_DT))  # (D, 3D)
        stk['bqkv'].append(jnp.zeros((1, 3 * D), jnp.float32))
        stk['wo'].append(nrm(next(keys), (D, D), dtype=W_DT))
        stk['bo'].append(jnp.zeros((1, D), jnp.float32))
        stk['ln1_g'].append(jnp.ones((1, D), jnp.float32))
        stk['ln1_b'].append(jnp.zeros((1, D), jnp.float32))
        stk['w1'].append(nrm(next(keys), (D, FF), dtype=W_DT))
        stk['b1'].append(jnp.zeros((1, FF), jnp.float32))
        stk['w2'].append(nrm(next(keys), (FF, D), dtype=W_DT))
        stk['b2'].append(jnp.zeros((1, D), jnp.float32))
        stk['ln2_g'].append(jnp.ones((1, D), jnp.float32))
        stk['ln2_b'].append(jnp.zeros((1, D), jnp.float32))
    # stack per-layer weights along a leading layer axis -> blocked by the grid
    params['stk'] = {n: jnp.stack(v, axis=0) for n, v in stk.items()}
    return params


# ---------------- Encoder forward ----------------
def xlm_encoder_forward(params, input_ids, attention_mask=None, langs=None,
                        token_type_ids=None, position_ids=None):
    """Equivalent of XLMRobertaEncoder.forward / extract_features (eval mode, no dropout)."""
    B, S = input_ids.shape
    BS = B * S
    if attention_mask is None:
        attention_mask = jnp.ones((B, S), dtype=jnp.int32)
    if position_ids is None:
        position_ids = jnp.broadcast_to(jnp.arange(S)[None, :], (B, S))

    # Embedding gathers (glue, not the hot path).
    h = jnp.take(params['word_emb'], input_ids, axis=0)
    h = h + jnp.take(params['pos_emb'], position_ids, axis=0)
    if langs is not None:
        h = h + jnp.take(params['lang_emb'], langs, axis=0)
    if token_type_ids is not None:
        h = h + jnp.take(params['word_emb'], token_type_ids, axis=0)

    mask = attention_mask.astype(jnp.float32)                 # (B, S) padding mask
    mask_col = mask.reshape(BS, 1)                            # multiplicative mask

    # Precompute the additive attention bias once:
    #   0 where (same batch) and (key position valid), else -1e9.
    batch_ids = jnp.arange(BS, dtype=jnp.int32) // S
    same_batch = batch_ids[:, None] == batch_ids[None, :]
    key_valid = mask.reshape(BS) > 0
    attn_bias = jnp.where(same_batch & key_valid[None, :],
                          jnp.float32(0.0), jnp.float32(NEG_INF))  # (BS, BS)

    x = h.reshape(BS, D).astype(jnp.float32)

    Lw = params['stk']
    args = (x, attn_bias, mask_col, params['ln_emb_g'], params['ln_emb_b'],
            Lw['wqkv'], Lw['bqkv'], Lw['wo'], Lw['bo'],
            Lw['ln1_g'], Lw['ln1_b'], Lw['w1'], Lw['b1'], Lw['w2'], Lw['b2'],
            Lw['ln2_g'], Lw['ln2_b'])

    def fixed_spec(shape):
        # same full tile at every layer iteration (VMEM-resident)
        n = len(shape)
        return pl.BlockSpec(shape, lambda l, _n=n: (0,) * _n)

    def layer_spec(shape):
        # stacked (N_LAYERS, ...) weight, one layer slice per grid step
        n = len(shape)
        return pl.BlockSpec((1,) + tuple(shape[1:]),
                            lambda l, _n=n: (l,) + (0,) * (_n - 1))

    in_specs = ([fixed_spec(a.shape) for a in args[:5]]
                + [layer_spec(a.shape) for a in args[5:]])

    out = pl.pallas_call(
        _encoder_kernel,
        out_shape=jax.ShapeDtypeStruct((BS, D), jnp.float32),
        grid_spec=pltpu.PrefetchScalarGridSpec(
            num_scalar_prefetch=0,
            grid=(N_LAYERS,),
            in_specs=in_specs,
            out_specs=fixed_spec((BS, D)),
            scratch_shapes=[pltpu.VMEM((BS, D), jnp.float32)],  # running hidden state
        ),
        compiler_params=pltpu.CompilerParams(
            dimension_semantics=("arbitrary",)),   # layers are sequential
    )(*args)

    return out.reshape(B, S, D)


if __name__ == "__main__":
    key = jax.random.PRNGKey(0)
    kp, ki, kl = jax.random.split(key, 3)
    params = init_params(kp)

    B, S = 2, 8
    input_ids = jax.random.randint(ki, (B, S), 0, VOCAB, dtype=jnp.int32)
    attention_mask = jnp.array([[1, 1, 1, 1, 1, 1, 1, 1],
                                [1, 1, 1, 1, 1, 1, 0, 0]], dtype=jnp.int32)
    langs = jax.random.randint(kl, (B, S), 0, N_LANGS, dtype=jnp.int32)

    fwd = jax.jit(xlm_encoder_forward)
    out = fwd(params, input_ids, attention_mask=attention_mask, langs=langs)
    jax.block_until_ready(out)

    assert out.shape == (B, S, D) and out.dtype == jnp.float32
    assert bool(jnp.all(jnp.isfinite(out)))
    print("KERNEL_OK")
</pallas_src>

<mosaic_0001>
module attributes {stable_mosaic.version = 11 : i64} {
  func.func @_encoder_kernel(%arg0: i32, %arg1: memref<16x32xf32, #tpu.memory_space<vmem>>, %arg2: memref<16x16xf32, #tpu.memory_space<vmem>>, %arg3: memref<16x1xf32, #tpu.memory_space<vmem>>, %arg4: memref<1x32xf32, #tpu.memory_space<vmem>>, %arg5: memref<1x32xf32, #tpu.memory_space<vmem>>, %arg6: memref<1x32x96xbf16, #tpu.memory_space<vmem>>, %arg7: memref<1x1x96xf32, #tpu.memory_space<vmem>>, %arg8: memref<1x32x32xbf16, #tpu.memory_space<vmem>>, %arg9: memref<1x1x32xf32, #tpu.memory_space<vmem>>, %arg10: memref<1x1x32xf32, #tpu.memory_space<vmem>>, %arg11: memref<1x1x32xf32, #tpu.memory_space<vmem>>, %arg12: memref<1x32x128xbf16, #tpu.memory_space<vmem>>, %arg13: memref<1x1x128xf32, #tpu.memory_space<vmem>>, %arg14: memref<1x128x32xbf16, #tpu.memory_space<vmem>>, %arg15: memref<1x1x32xf32, #tpu.memory_space<vmem>>, %arg16: memref<1x1x32xf32, #tpu.memory_space<vmem>>, %arg17: memref<1x1x32xf32, #tpu.memory_space<vmem>>, %arg18: memref<16x32xf32, #tpu.memory_space<vmem>>, %arg19: memref<16x32xf32, #tpu.memory_space<vmem>>) attributes {dimension_semantics = [#tpu.dimension_semantics<arbitrary>], iteration_bounds = array<i64: 2>, scalar_prefetch = 0 : i64, scratch_operands = 1 : i64, tpu.core_type = #tpu.core_type<tc>, window_params = [{pipeline_mode = #tpu.pipeline_mode<synchronous>, transform_indices = @transform_0, window_bounds = array<i64: 16, 32>}, {pipeline_mode = #tpu.pipeline_mode<synchronous>, transform_indices = @transform_1, window_bounds = array<i64: 16, 16>}, {pipeline_mode = #tpu.pipeline_mode<synchronous>, transform_indices = @transform_2, window_bounds = array<i64: 16, 1>}, {pipeline_mode = #tpu.pipeline_mode<synchronous>, transform_indices = @transform_3, window_bounds = array<i64: 1, 32>}, {pipeline_mode = #tpu.pipeline_mode<synchronous>, transform_indices = @transform_4, window_bounds = array<i64: 1, 32>}, {transform_indices = @transform_5, window_bounds = array<i64: 1, 32, 96>}, {transform_indices = @transform_6, window_bounds = array<i64: 1, 1, 96>}, {transform_indices = @transform_7, window_bounds = array<i64: 1, 32, 32>}, {transform_indices = @transform_8, window_bounds = array<i64: 1, 1, 32>}, {transform_indices = @transform_9, window_bounds = array<i64: 1, 1, 32>}, {transform_indices = @transform_10, window_bounds = array<i64: 1, 1, 32>}, {transform_indices = @transform_11, window_bounds = array<i64: 1, 32, 128>}, {transform_indices = @transform_12, window_bounds = array<i64: 1, 1, 128>}, {transform_indices = @transform_13, window_bounds = array<i64: 1, 128, 32>}, {transform_indices = @transform_14, window_bounds = array<i64: 1, 1, 32>}, {transform_indices = @transform_15, window_bounds = array<i64: 1, 1, 32>}, {transform_indices = @transform_16, window_bounds = array<i64: 1, 1, 32>}, {pipeline_mode = #tpu.pipeline_mode<synchronous>, transform_indices = @transform_17, window_bounds = array<i64: 16, 32>}]} {
    %c0 = arith.constant 0 : index
    %c0_0 = arith.constant 0 : index
    %0 = vector.load %arg3[%c0, %c0_0] : memref<16x1xf32, #tpu.memory_space<vmem>>, vector<16x1xf32>
    %c0_1 = arith.constant 0 : index
    %c0_2 = arith.constant 0 : index
    %1 = vector.load %arg2[%c0_1, %c0_2] : memref<16x16xf32, #tpu.memory_space<vmem>>, vector<16x16xf32>
    %c0_i32 = arith.constant 0 : i32
    %2 = arith.cmpi eq, %arg0, %c0_i32 : i32
    %3 = arith.extui %2 : i1 to i32
    %c0_i32_3 = arith.constant 0 : i32
    %4 = arith.cmpi ne, %3, %c0_i32_3 : i32
    scf.if %4 {
      %c0_86 = arith.constant 0 : index
      %c0_87 = arith.constant 0 : index
      %199 = vector.load %arg1[%c0_86, %c0_87] : memref<16x32xf32, #tpu.memory_space<vmem>>, vector<16x32xf32>
      %c0_88 = arith.constant 0 : index
      %c0_89 = arith.constant 0 : index
      %200 = vector.load %arg4[%c0_88, %c0_89] : memref<1x32xf32, #tpu.memory_space<vmem>>, vector<1x32xf32>
      %c0_90 = arith.constant 0 : index
      %c0_91 = arith.constant 0 : index
      %201 = vector.load %arg5[%c0_90, %c0_91] : memref<1x32xf32, #tpu.memory_space<vmem>>, vector<1x32xf32>
      %cst_92 = arith.constant dense<0.000000e+00> : vector<16xf32>
      %202 = vector.multi_reduction <add>, %199, %cst_92 [1] : vector<16x32xf32> to vector<16xf32>
      %203 = vector.shape_cast %202 : vector<16xf32> to vector<16x1xf32>
      %cst_93 = arith.constant 3.200000e+01 : f32
      %204 = vector.broadcast %cst_93 : f32 to vector<16x1xf32>
      %205 = arith.divf %203, %204 : vector<16x1xf32>
      %206 = vector.broadcast %205 : vector<16x1xf32> to vector<16x32xf32>
      %207 = arith.subf %199, %206 : vector<16x32xf32>
      %208 = arith.mulf %207, %207 : vector<16x32xf32>
      %cst_94 = arith.constant dense<0.000000e+00> : vector<16xf32>
      %209 = vector.multi_reduction <add>, %208, %cst_94 [1] : vector<16x32xf32> to vector<16xf32>
      %210 = vector.shape_cast %209 : vector<16xf32> to vector<16x1xf32>
      %cst_95 = arith.constant 3.200000e+01 : f32
      %211 = vector.broadcast %cst_95 : f32 to vector<16x1xf32>
      %212 = arith.divf %210, %211 : vector<16x1xf32>
      %213 = vector.broadcast %205 : vector<16x1xf32> to vector<16x32xf32>
      %214 = arith.subf %199, %213 : vector<16x32xf32>
      %cst_96 = arith.constant 9.99999996E-13 : f32
      %215 = vector.broadcast %cst_96 : f32 to vector<16x1xf32>
      %216 = arith.addf %212, %215 : vector<16x1xf32>
      %217 = math.rsqrt %216 : vector<16x1xf32>
      %218 = vector.broadcast %217 : vector<16x1xf32> to vector<16x32xf32>
      %219 = arith.mulf %214, %218 : vector<16x32xf32>
      %220 = vector.broadcast %200 : vector<1x32xf32> to vector<16x32xf32>
      %221 = arith.mulf %219, %220 : vector<16x32xf32>
      %222 = vector.broadcast %201 : vector<1x32xf32> to vector<16x32xf32>
      %223 = arith.addf %221, %222 : vector<16x32xf32>
      %224 = vector.broadcast %0 : vector<16x1xf32> to vector<16x32xf32>
      %225 = arith.mulf %223, %224 : vector<16x32xf32>
      %c0_97 = arith.constant 0 : index
      %c0_98 = arith.constant 0 : index
      %226 = vector.load %arg19[%c0_97, %c0_98] : memref<16x32xf32, #tpu.memory_space<vmem>>, vector<16x32xf32>
      tpu.vector_store %arg19[%c0_97, %c0_98], %225 {strides = array<i32>} : memref<16x32xf32, #tpu.memory_space<vmem>>, vector<16x32xf32>,
    } else {
    }
    %c0_4 = arith.constant 0 : index
    %c0_5 = arith.constant 0 : index
    %5 = vector.load %arg19[%c0_4, %c0_5] : memref<16x32xf32, #tpu.memory_space<vmem>>, vector<16x32xf32>
    %c0_6 = arith.constant 0 : index
    %c0_7 = arith.constant 0 : index
    %c0_8 = arith.constant 0 : index
    %6 = vector.load %arg6[%c0_6, %c0_7, %c0_8] : memref<1x32x96xbf16, #tpu.memory_space<vmem>>, vector<1x32x96xbf16>
    %7 = vector.shape_cast %6 : vector<1x32x96xbf16> to vector<32x96xbf16>
    %8 = arith.truncf %5 : vector<16x32xf32> to vector<16x32xbf16>
    %cst = arith.constant dense<0.000000e+00> : vector<16x96xf32>
    %9 = tpu.matmul %8, %7, %cst {dimension_numbers = #tpu.dot_dimension_numbers<[1], [0], [0], [1], [0, 0, 1, 1], [], []>} : vector<16x32xbf16>, vector<32x96xbf16>, vector<16x96xf32> -> vector<16x96xf32>
    %c0_9 = arith.constant 0 : index
    %c0_10 = arith.constant 0 : index
    %c0_11 = arith.constant 0 : index
    %10 = vector.load %arg7[%c0_9, %c0_10, %c0_11] : memref<1x1x96xf32, #tpu.memory_space<vmem>>, vector<1x1x96xf32>
    %11 = vector.shape_cast %10 : vector<1x1x96xf32> to vector<1x96xf32>
    %12 = vector.broadcast %11 : vector<1x96xf32> to vector<16x96xf32>
    %13 = arith.addf %9, %12 : vector<16x96xf32>
    %14 = arith.truncf %13 : vector<16x96xf32> to vector<16x96xbf16>
    %c0_12 = arith.constant 0 : index
    %c0_13 = arith.constant 0 : index
    %c0_14 = arith.constant 0 : index
    %15 = vector.load %arg8[%c0_12, %c0_13, %c0_14] : memref<1x32x32xbf16, #tpu.memory_space<vmem>>, vector<1x32x32xbf16>
    %16 = vector.shape_cast %15 : vector<1x32x32xbf16> to vector<32x32xbf16>
    %17 = vector.extract_strided_slice %14 {offsets = [0, 0], sizes = [16, 8], strides = [1, 1]} : vector<16x96xbf16> to vector<16x8xbf16>
    %18 = vector.extract_strided_slice %14 {offsets = [0, 32], sizes = [16, 8], strides = [1, 1]} : vector<16x96xbf16> to vector<16x8xbf16>
    %19 = vector.extract_strided_slice %14 {offsets = [0, 64], sizes = [16, 8], strides = [1, 1]} : vector<16x96xbf16> to vector<16x8xbf16>
    %cst_15 = arith.constant dense<0.000000e+00> : vector<16x16xf32>
    %20 = tpu.matmul %17, %18, %cst_15 {dimension_numbers = #tpu.dot_dimension_numbers<[1], [1], [0], [0], [0, 0, 1, 0], [], []>} : vector<16x8xbf16>, vector<16x8xbf16>, vector<16x16xf32> -> vector<16x16xf32>
    %cst_16 = arith.constant 0.353553385 : f32
    %21 = vector.broadcast %cst_16 : f32 to vector<16x16xf32>
    %22 = arith.mulf %20, %21 : vector<16x16xf32>
    %23 = arith.addf %22, %1 : vector<16x16xf32>
    %cst_17 = arith.constant dense<0xFF800000> : vector<16xf32>
    %24 = vector.multi_reduction <maximumf>, %23, %cst_17 [1] : vector<16x16xf32> to vector<16xf32>
    %25 = vector.shape_cast %24 : vector<16xf32> to vector<16x1xf32>
    %26 = vector.broadcast %25 : vector<16x1xf32> to vector<16x16xf32>
    %27 = arith.subf %23, %26 : vector<16x16xf32>
    %28 = math.exp %27 : vector<16x16xf32>
    %cst_18 = arith.constant dense<0.000000e+00> : vector<16xf32>
    %29 = vector.multi_reduction <add>, %28, %cst_18 [1] : vector<16x16xf32> to vector<16xf32>
    %30 = vector.shape_cast %29 : vector<16xf32> to vector<16x1xf32>
    %31 = tpu.reciprocal %30 {approx = true} : vector<16x1xf32> -> vector<16x1xf32>
    %32 = vector.broadcast %31 : vector<16x1xf32> to vector<16x16xf32>
    %33 = arith.mulf %28, %32 : vector<16x16xf32>
    %34 = arith.truncf %33 : vector<16x16xf32> to vector<16x16xbf16>
    %cst_19 = arith.constant dense<0.000000e+00> : vector<16x8xf32>
    %35 = tpu.matmul %34, %19, %cst_19 {dimension_numbers = #tpu.dot_dimension_numbers<[1], [0], [0], [1], [0, 0, 1, 1], [], []>} : vector<16x16xbf16>, vector<16x8xbf16>, vector<16x8xf32> -> vector<16x8xf32>
    %36 = vector.extract_strided_slice %16 {offsets = [0, 0], sizes = [8, 32], strides = [1, 1]} : vector<32x32xbf16> to vector<8x32xbf16>
    %37 = arith.truncf %35 : vector<16x8xf32> to vector<16x8xbf16>
    %cst_20 = arith.constant dense<0.000000e+00> : vector<16x32xf32>
    %38 = tpu.matmul %37, %36, %cst_20 {dimension_numbers = #tpu.dot_dimension_numbers<[1], [0], [0], [1], [0, 0, 1, 1], [], []>} : vector<16x8xbf16>, vector<8x32xbf16>, vector<16x32xf32> -> vector<16x32xf32>
    %39 = vector.extract_strided_slice %14 {offsets = [0, 8], sizes = [16, 8], strides = [1, 1]} : vector<16x96xbf16> to vector<16x8xbf16>
    %40 = vector.extract_strided_slice %14 {offsets = [0, 40], sizes = [16, 8], strides = [1, 1]} : vector<16x96xbf16> to vector<16x8xbf16>
    %41 = vector.extract_strided_slice %14 {offsets = [0, 72], sizes = [16, 8], strides = [1, 1]} : vector<16x96xbf16> to vector<16x8xbf16>
    %cst_21 = arith.constant dense<0.000000e+00> : vector<16x16xf32>
    %42 = tpu.matmul %39, %40, %cst_21 {dimension_numbers = #tpu.dot_dimension_numbers<[1], [1], [0], [0], [0, 0, 1, 0], [], []>} : vector<16x8xbf16>, vector<16x8xbf16>, vector<16x16xf32> -> vector<16x16xf32>
    %cst_22 = arith.constant 0.353553385 : f32
    %43 = vector.broadcast %cst_22 : f32 to vector<16x16xf32>
    %44 = arith.mulf %42, %43 : vector<16x16xf32>
    %45 = arith.addf %44, %1 : vector<16x16xf32>
    %cst_23 = arith.constant dense<0xFF800000> : vector<16xf32>
    %46 = vector.multi_reduction <maximumf>, %45, %cst_23 [1] : vector<16x16xf32> to vector<16xf32>
    %47 = vector.shape_cast %46 : vector<16xf32> to vector<16x1xf32>
    %48 = vector.broadcast %47 : vector<16x1xf32> to vector<16x16xf32>
    %49 = arith.subf %45, %48 : vector<16x16xf32>
    %50 = math.exp %49 : vector<16x16xf32>
    %cst_24 = arith.constant dense<0.000000e+00> : vector<16xf32>
    %51 = vector.multi_reduction <add>, %50, %cst_24 [1] : vector<16x16xf32> to vector<16xf32>
    %52 = vector.shape_cast %51 : vector<16xf32> to vector<16x1xf32>
    %53 = tpu.reciprocal %52 {approx = true} : vector<16x1xf32> -> vector<16x1xf32>
    %54 = vector.broadcast %53 : vector<16x1xf32> to vector<16x16xf32>
    %55 = arith.mulf %50, %54 : vector<16x16xf32>
    %56 = arith.truncf %55 : vector<16x16xf32> to vector<16x16xbf16>
    %cst_25 = arith.constant dense<0.000000e+00> : vector<16x8xf32>
    %57 = tpu.matmul %56, %41, %cst_25 {dimension_numbers = #tpu.dot_dimension_numbers<[1], [0], [0], [1], [0, 0, 1, 1], [], []>} : vector<16x16xbf16>, vector<16x8xbf16>, vector<16x8xf32> -> vector<16x8xf32>
    %58 = vector.extract_strided_slice %16 {offsets = [8, 0], sizes = [8, 32], strides = [1, 1]} : vector<32x32xbf16> to vector<8x32xbf16>
    %59 = arith.truncf %57 : vector<16x8xf32> to vector<16x8xbf16>
    %cst_26 = arith.constant dense<0.000000e+00> : vector<16x32xf32>
    %60 = tpu.matmul %59, %58, %cst_26 {dimension_numbers = #tpu.dot_dimension_numbers<[1], [0], [0], [1], [0, 0, 1, 1], [], []>} : vector<16x8xbf16>, vector<8x32xbf16>, vector<16x32xf32> -> vector<16x32xf32>
    %61 = arith.addf %38, %60 : vector<16x32xf32>
    %62 = vector.extract_strided_slice %14 {offsets = [0, 16], sizes = [16, 8], strides = [1, 1]} : vector<16x96xbf16> to vector<16x8xbf16>
    %63 = vector.extract_strided_slice %14 {offsets = [0, 48], sizes = [16, 8], strides = [1, 1]} : vector<16x96xbf16> to vector<16x8xbf16>
    %64 = vector.extract_strided_slice %14 {offsets = [0, 80], sizes = [16, 8], strides = [1, 1]} : vector<16x96xbf16> to vector<16x8xbf16>
    %cst_27 = arith.constant dense<0.000000e+00> : vector<16x16xf32>
    %65 = tpu.matmul %62, %63, %cst_27 {dimension_numbers = #tpu.dot_dimension_numbers<[1], [1], [0], [0], [0, 0, 1, 0], [], []>} : vector<16x8xbf16>, vector<16x8xbf16>, vector<16x16xf32> -> vector<16x16xf32>
    %cst_28 = arith.constant 0.353553385 : f32
    %66 = vector.broadcast %cst_28 : f32 to vector<16x16xf32>
    %67 = arith.mulf %65, %66 : vector<16x16xf32>
    %68 = arith.addf %67, %1 : vector<16x16xf32>
    %cst_29 = arith.constant dense<0xFF800000> : vector<16xf32>
    %69 = vector.multi_reduction <maximumf>, %68, %cst_29 [1] : vector<16x16xf32> to vector<16xf32>
    %70 = vector.shape_cast %69 : vector<16xf32> to vector<16x1xf32>
    %71 = vector.broadcast %70 : vector<16x1xf32> to vector<16x16xf32>
    %72 = arith.subf %68, %71 : vector<16x16xf32>
    %73 = math.exp %72 : vector<16x16xf32>
    %cst_30 = arith.constant dense<0.000000e+00> : vector<16xf32>
    %74 = vector.multi_reduction <add>, %73, %cst_30 [1] : vector<16x16xf32> to vector<16xf32>
    %75 = vector.shape_cast %74 : vector<16xf32> to vector<16x1xf32>
    %76 = tpu.reciprocal %75 {approx = true} : vector<16x1xf32> -> vector<16x1xf32>
    %77 = vector.broadcast %76 : vector<16x1xf32> to vector<16x16xf32>
    %78 = arith.mulf %73, %77 : vector<16x16xf32>
    %79 = arith.truncf %78 : vector<16x16xf32> to vector<16x16xbf16>
    %cst_31 = arith.constant dense<0.000000e+00> : vector<16x8xf32>
    %80 = tpu.matmul %79, %64, %cst_31 {dimension_numbers = #tpu.dot_dimension_numbers<[1], [0], [0], [1], [0, 0, 1, 1], [], []>} : vector<16x16xbf16>, vector<16x8xbf16>, vector<16x8xf32> -> vector<16x8xf32>
    %81 = vector.extract_strided_slice %16 {offsets = [16, 0], sizes = [8, 32], strides = [1, 1]} : vector<32x32xbf16> to vector<8x32xbf16>
    %82 = arith.truncf %80 : vector<16x8xf32> to vector<16x8xbf16>
    %cst_32 = arith.constant dense<0.000000e+00> : vector<16x32xf32>
    %83 = tpu.matmul %82, %81, %cst_32 {dimension_numbers = #tpu.dot_dimension_numbers<[1], [0], [0], [1], [0, 0, 1, 1], [], []>} : vector<16x8xbf16>, vector<8x32xbf16>, vector<16x32xf32> -> vector<16x32xf32>
    %84 = arith.addf %61, %83 : vector<16x32xf32>
    %85 = vector.extract_strided_slice %14 {offsets = [0, 24], sizes = [16, 8], strides = [1, 1]} : vector<16x96xbf16> to vector<16x8xbf16>
    %86 = vector.extract_strided_slice %14 {offsets = [0, 56], sizes = [16, 8], strides = [1, 1]} : vector<16x96xbf16> to vector<16x8xbf16>
    %87 = vector.extract_strided_slice %14 {offsets = [0, 88], sizes = [16, 8], strides = [1, 1]} : vector<16x96xbf16> to vector<16x8xbf16>
    %cst_33 = arith.constant dense<0.000000e+00> : vector<16x16xf32>
    %88 = tpu.matmul %85, %86, %cst_33 {dimension_numbers = #tpu.dot_dimension_numbers<[1], [1], [0], [0], [0, 0, 1, 0], [], []>} : vector<16x8xbf16>, vector<16x8xbf16>, vector<16x16xf32> -> vector<16x16xf32>
    %cst_34 = arith.constant 0.353553385 : f32
    %89 = vector.broadcast %cst_34 : f32 to vector<16x16xf32>
    %90 = arith.mulf %88, %89 : vector<16x16xf32>
    %91 = arith.addf %90, %1 : vector<16x16xf32>
    %cst_35 = arith.constant dense<0xFF800000> : vector<16xf32>
    %92 = vector.multi_reduction <maximumf>, %91, %cst_35 [1] : vector<16x16xf32> to vector<16xf32>
    %93 = vector.shape_cast %92 : vector<16xf32> to vector<16x1xf32>
    %94 = vector.broadcast %93 : vector<16x1xf32> to vector<16x16xf32>
    %95 = arith.subf %91, %94 : vector<16x16xf32>
    %96 = math.exp %95 : vector<16x16xf32>
    %cst_36 = arith.constant dense<0.000000e+00> : vector<16xf32>
    %97 = vector.multi_reduction <add>, %96, %cst_36 [1] : vector<16x16xf32> to vector<16xf32>
    %98 = vector.shape_cast %97 : vector<16xf32> to vector<16x1xf32>
    %99 = tpu.reciprocal %98 {approx = true} : vector<16x1xf32> -> vector<16x1xf32>
    %100 = vector.broadcast %99 : vector<16x1xf32> to vector<16x16xf32>
    %101 = arith.mulf %96, %100 : vector<16x16xf32>
    %102 = arith.truncf %101 : vector<16x16xf32> to vector<16x16xbf16>
    %cst_37 = arith.constant dense<0.000000e+00> : vector<16x8xf32>
    %103 = tpu.matmul %102, %87, %cst_37 {dimension_numbers = #tpu.dot_dimension_numbers<[1], [0], [0], [1], [0, 0, 1, 1], [], []>} : vector<16x16xbf16>, vector<16x8xbf16>, vector<16x8xf32> -> vector<16x8xf32>
    %104 = vector.extract_strided_slice %16 {offsets = [24, 0], sizes = [8, 32], strides = [1, 1]} : vector<32x32xbf16> to vector<8x32xbf16>
    %105 = arith.truncf %103 : vector<16x8xf32> to vector<16x8xbf16>
    %cst_38 = arith.constant dense<0.000000e+00> : vector<16x32xf32>
    %106 = tpu.matmul %105, %104, %cst_38 {dimension_numbers = #tpu.dot_dimension_numbers<[1], [0], [0], [1], [0, 0, 1, 1], [], []>} : vector<16x8xbf16>, vector<8x32xbf16>, vector<16x32xf32> -> vector<16x32xf32>
    %107 = arith.addf %84, %106 : vector<16x32xf32>
    %c0_39 = arith.constant 0 : index
    %c0_40 = arith.constant 0 : index
    %c0_41 = arith.constant 0 : index
    %108 = vector.load %arg9[%c0_39, %c0_40, %c0_41] : memref<1x1x32xf32, #tpu.memory_space<vmem>>, vector<1x1x32xf32>
    %109 = vector.shape_cast %108 : vector<1x1x32xf32> to vector<1x32xf32>
    %110 = vector.broadcast %109 : vector<1x32xf32> to vector<16x32xf32>
    %111 = arith.addf %107, %110 : vector<16x32xf32>
    %112 = arith.addf %5, %111 : vector<16x32xf32>
    %c0_42 = arith.constant 0 : index
    %c0_43 = arith.constant 0 : index
    %c0_44 = arith.constant 0 : index
    %113 = vector.load %arg10[%c0_42, %c0_43, %c0_44] : memref<1x1x32xf32, #tpu.memory_space<vmem>>, vector<1x1x32xf32>
    %114 = vector.shape_cast %113 : vector<1x1x32xf32> to vector<1x32xf32>
    %c0_45 = arith.constant 0 : index
    %c0_46 = arith.constant 0 : index
    %c0_47 = arith.constant 0 : index
    %115 = vector.load %arg11[%c0_45, %c0_46, %c0_47] : memref<1x1x32xf32, #tpu.memory_space<vmem>>, vector<1x1x32xf32>
    %116 = vector.shape_cast %115 : vector<1x1x32xf32> to vector<1x32xf32>
    %cst_48 = arith.constant dense<0.000000e+00> : vector<16xf32>
    %117 = vector.multi_reduction <add>, %112, %cst_48 [1] : vector<16x32xf32> to vector<16xf32>
    %118 = vector.shape_cast %117 : vector<16xf32> to vector<16x1xf32>
    %cst_49 = arith.constant 3.200000e+01 : f32
    %119 = vector.broadcast %cst_49 : f32 to vector<16x1xf32>
    %120 = arith.divf %118, %119 : vector<16x1xf32>
    %121 = vector.broadcast %120 : vector<16x1xf32> to vector<16x32xf32>
    %122 = arith.subf %112, %121 : vector<16x32xf32>
    %123 = arith.mulf %122, %122 : vector<16x32xf32>
    %cst_50 = arith.constant dense<0.000000e+00> : vector<16xf32>
    %124 = vector.multi_reduction <add>, %123, %cst_50 [1] : vector<16x32xf32> to vector<16xf32>
    %125 = vector.shape_cast %124 : vector<16xf32> to vector<16x1xf32>
    %cst_51 = arith.constant 3.200000e+01 : f32
    %126 = vector.broadcast %cst_51 : f32 to vector<16x1xf32>
    %127 = arith.divf %125, %126 : vector<16x1xf32>
    %128 = vector.broadcast %120 : vector<16x1xf32> to vector<16x32xf32>
    %129 = arith.subf %112, %128 : vector<16x32xf32>
    %cst_52 = arith.constant 9.99999996E-13 : f32
    %130 = vector.broadcast %cst_52 : f32 to vector<16x1xf32>
    %131 = arith.addf %127, %130 : vector<16x1xf32>
    %132 = math.rsqrt %131 : vector<16x1xf32>
    %133 = vector.broadcast %132 : vector<16x1xf32> to vector<16x32xf32>
    %134 = arith.mulf %129, %133 : vector<16x32xf32>
    %135 = vector.broadcast %114 : vector<1x32xf32> to vector<16x32xf32>
    %136 = arith.mulf %134, %135 : vector<16x32xf32>
    %137 = vector.broadcast %116 : vector<1x32xf32> to vector<16x32xf32>
    %138 = arith.addf %136, %137 : vector<16x32xf32>
    %c0_53 = arith.constant 0 : index
    %c0_54 = arith.constant 0 : index
    %c0_55 = arith.constant 0 : index
    %139 = vector.load %arg12[%c0_53, %c0_54, %c0_55] : memref<1x32x128xbf16, #tpu.memory_space<vmem>>, vector<1x32x128xbf16>
    %140 = vector.shape_cast %139 : vector<1x32x128xbf16> to vector<32x128xbf16>
    %141 = arith.truncf %138 : vector<16x32xf32> to vector<16x32xbf16>
    %cst_56 = arith.constant dense<0.000000e+00> : vector<16x128xf32>
    %142 = tpu.matmul %141, %140, %cst_56 {dimension_numbers = #tpu.dot_dimension_numbers<[1], [0], [0], [1], [0, 0, 1, 1], [], []>} : vector<16x32xbf16>, vector<32x128xbf16>, vector<16x128xf32> -> vector<16x128xf32>
    %c0_57 = arith.constant 0 : index
    %c0_58 = arith.constant 0 : index
    %c0_59 = arith.constant 0 : index
    %143 = vector.load %arg13[%c0_57, %c0_58, %c0_59] : memref<1x1x128xf32, #tpu.memory_space<vmem>>, vector<1x1x128xf32>
    %144 = vector.shape_cast %143 : vector<1x1x128xf32> to vector<1x128xf32>
    %145 = vector.broadcast %144 : vector<1x128xf32> to vector<16x128xf32>
    %146 = arith.addf %142, %145 : vector<16x128xf32>
    %cst_60 = arith.constant 5.000000e-01 : f32
    %147 = vector.broadcast %cst_60 : f32 to vector<16x128xf32>
    %148 = arith.mulf %147, %146 : vector<16x128xf32>
    %cst_61 = arith.constant 4.471500e-02 : f32
    %149 = vector.broadcast %cst_61 : f32 to vector<16x128xf32>
    %150 = arith.mulf %149, %146 : vector<16x128xf32>
    %151 = arith.mulf %150, %146 : vector<16x128xf32>
    %152 = arith.mulf %151, %146 : vector<16x128xf32>
    %153 = arith.addf %146, %152 : vector<16x128xf32>
    %cst_62 = arith.constant 0.797884583 : f32
    %154 = vector.broadcast %cst_62 : f32 to vector<16x128xf32>
    %155 = arith.mulf %154, %153 : vector<16x128xf32>
    %156 = math.tanh %155 : vector<16x128xf32>
    %cst_63 = arith.constant 1.000000e+00 : f32
    %157 = vector.broadcast %cst_63 : f32 to vector<16x128xf32>
    %158 = arith.addf %157, %156 : vector<16x128xf32>
    %159 = arith.mulf %148, %158 : vector<16x128xf32>
    %c0_64 = arith.constant 0 : index
    %c0_65 = arith.constant 0 : index
    %c0_66 = arith.constant 0 : index
    %160 = vector.load %arg14[%c0_64, %c0_65, %c0_66] : memref<1x128x32xbf16, #tpu.memory_space<vmem>>, vector<1x128x32xbf16>
    %161 = vector.shape_cast %160 : vector<1x128x32xbf16> to vector<128x32xbf16>
    %162 = arith.truncf %159 : vector<16x128xf32> to vector<16x128xbf16>
    %cst_67 = arith.constant dense<0.000000e+00> : vector<16x32xf32>
    %163 = tpu.matmul %162, %161, %cst_67 {dimension_numbers = #tpu.dot_dimension_numbers<[1], [0], [0], [1], [0, 0, 1, 1], [], []>} : vector<16x128xbf16>, vector<128x32xbf16>, vector<16x32xf32> -> vector<16x32xf32>
    %c0_68 = arith.constant 0 : index
    %c0_69 = arith.constant 0 : index
    %c0_70 = arith.constant 0 : index
    %164 = vector.load %arg15[%c0_68, %c0_69, %c0_70] : memref<1x1x32xf32, #tpu.memory_space<vmem>>, vector<1x1x32xf32>
    %165 = vector.shape_cast %164 : vector<1x1x32xf32> to vector<1x32xf32>
    %166 = vector.broadcast %165 : vector<1x32xf32> to vector<16x32xf32>
    %167 = arith.addf %163, %166 : vector<16x32xf32>
    %168 = arith.addf %138, %167 : vector<16x32xf32>
    %c0_71 = arith.constant 0 : index
    %c0_72 = arith.constant 0 : index
    %c0_73 = arith.constant 0 : index
    %169 = vector.load %arg16[%c0_71, %c0_72, %c0_73] : memref<1x1x32xf32, #tpu.memory_space<vmem>>, vector<1x1x32xf32>
    %170 = vector.shape_cast %169 : vector<1x1x32xf32> to vector<1x32xf32>
    %c0_74 = arith.constant 0 : index
    %c0_75 = arith.constant 0 : index
    %c0_76 = arith.constant 0 : index
    %171 = vector.load %arg17[%c0_74, %c0_75, %c0_76] : memref<1x1x32xf32, #tpu.memory_space<vmem>>, vector<1x1x32xf32>
    %172 = vector.shape_cast %171 : vector<1x1x32xf32> to vector<1x32xf32>
    %cst_77 = arith.constant dense<0.000000e+00> : vector<16xf32>
    %173 = vector.multi_reduction <add>, %168, %cst_77 [1] : vector<16x32xf32> to vector<16xf32>
    %174 = vector.shape_cast %173 : vector<16xf32> to vector<16x1xf32>
    %cst_78 = arith.constant 3.200000e+01 : f32
    %175 = vector.broadcast %cst_78 : f32 to vector<16x1xf32>
    %176 = arith.divf %174, %175 : vector<16x1xf32>
    %177 = vector.broadcast %176 : vector<16x1xf32> to vector<16x32xf32>
    %178 = arith.subf %168, %177 : vector<16x32xf32>
    %179 = arith.mulf %178, %178 : vector<16x32xf32>
    %cst_79 = arith.constant dense<0.000000e+00> : vector<16xf32>
    %180 = vector.multi_reduction <add>, %179, %cst_79 [1] : vector<16x32xf32> to vector<16xf32>
    %181 = vector.shape_cast %180 : vector<16xf32> to vector<16x1xf32>
    %cst_80 = arith.constant 3.200000e+01 : f32
    %182 = vector.broadcast %cst_80 : f32 to vector<16x1xf32>
    %183 = arith.divf %181, %182 : vector<16x1xf32>
    %184 = vector.broadcast %176 : vector<16x1xf32> to vector<16x32xf32>
    %185 = arith.subf %168, %184 : vector<16x32xf32>
    %cst_81 = arith.constant 9.99999996E-13 : f32
    %186 = vector.broadcast %cst_81 : f32 to vector<16x1xf32>
    %187 = arith.addf %183, %186 : vector<16x1xf32>
    %188 = math.rsqrt %187 : vector<16x1xf32>
    %189 = vector.broadcast %188 : vector<16x1xf32> to vector<16x32xf32>
    %190 = arith.mulf %185, %189 : vector<16x32xf32>
    %191 = vector.broadcast %170 : vector<1x32xf32> to vector<16x32xf32>
    %192 = arith.mulf %190, %191 : vector<16x32xf32>
    %193 = vector.broadcast %172 : vector<1x32xf32> to vector<16x32xf32>
    %194 = arith.addf %192, %193 : vector<16x32xf32>
    %195 = vector.broadcast %0 : vector<16x1xf32> to vector<16x32xf32>
    %196 = arith.mulf %194, %195 : vector<16x32xf32>
    %c0_82 = arith.constant 0 : index
    %c0_83 = arith.constant 0 : index
    %197 = vector.load %arg19[%c0_82, %c0_83] : memref<16x32xf32, #tpu.memory_space<vmem>>, vector<16x32xf32>
    tpu.vector_store %arg19[%c0_82, %c0_83], %196 {strides = array<i32>} : memref<16x32xf32, #tpu.memory_space<vmem>>, vector<16x32xf32>,
    %c0_84 = arith.constant 0 : index
    %c0_85 = arith.constant 0 : index
    %198 = vector.load %arg18[%c0_84, %c0_85] : memref<16x32xf32, #tpu.memory_space<vmem>>, vector<16x32xf32>
    tpu.vector_store %arg18[%c0_84, %c0_85], %196 {strides = array<i32>} : memref<16x32xf32, #tpu.memory_space<vmem>>, vector<16x32xf32>,
    return
  }
  func.func @transform_0(%arg0: i32) -> (i32, i32) {
    %c0_i32 = arith.constant 0 : i32
    %c0_i32_0 = arith.constant 0 : i32
    %c0_i32_1 = arith.constant 0 : i32
    return %c0_i32, %c0_i32_0 : i32, i32
  }
  func.func @transform_1(%arg0: i32) -> (i32, i32) {
    %c0_i32 = arith.constant 0 : i32
    %c0_i32_0 = arith.constant 0 : i32
    %c0_i32_1 = arith.constant 0 : i32
    return %c0_i32, %c0_i32_0 : i32, i32
  }
  func.func @transform_2(%arg0: i32) -> (i32, i32) {
    %c0_i32 = arith.constant 0 : i32
    %c0_i32_0 = arith.constant 0 : i32
    %c0_i32_1 = arith.constant 0 : i32
    return %c0_i32, %c0_i32_0 : i32, i32
  }
  func.func @transform_3(%arg0: i32) -> (i32, i32) {
    %c0_i32 = arith.constant 0 : i32
    %c0_i32_0 = arith.constant 0 : i32
    %c0_i32_1 = arith.constant 0 : i32
    return %c0_i32, %c0_i32_0 : i32, i32
  }
  func.func @transform_4(%arg0: i32) -> (i32, i32) {
    %c0_i32 = arith.constant 0 : i32
    %c0_i32_0 = arith.constant 0 : i32
    %c0_i32_1 = arith.constant 0 : i32
    return %c0_i32, %c0_i32_0 : i32, i32
  }
  func.func @transform_5(%arg0: i32) -> (i32, i32, i32) {
    %c0_i32 = arith.constant 0 : i32
    %c0_i32_0 = arith.constant 0 : i32
    %c0_i32_1 = arith.constant 0 : i32
    return %arg0, %c0_i32, %c0_i32_0 : i32, i32, i32
  }
  func.func @transform_6(%arg0: i32) -> (i32, i32, i32) {
    %c0_i32 = arith.constant 0 : i32
    %c0_i32_0 = arith.constant 0 : i32
    %c0_i32_1 = arith.constant 0 : i32
    return %arg0, %c0_i32, %c0_i32_0 : i32, i32, i32
  }
  func.func @transform_7(%arg0: i32) -> (i32, i32, i32) {
    %c0_i32 = arith.constant 0 : i32
    %c0_i32_0 = arith.constant 0 : i32
    %c0_i32_1 = arith.constant 0 : i32
    return %arg0, %c0_i32, %c0_i32_0 : i32, i32, i32
  }
  func.func @transform_8(%arg0: i32) -> (i32, i32, i32) {
    %c0_i32 = arith.constant 0 : i32
    %c0_i32_0 = arith.constant 0 : i32
    %c0_i32_1 = arith.constant 0 : i32
    return %arg0, %c0_i32, %c0_i32_0 : i32, i32, i32
  }
  func.func @transform_9(%arg0: i32) -> (i32, i32, i32) {
    %c0_i32 = arith.constant 0 : i32
    %c0_i32_0 = arith.constant 0 : i32
    %c0_i32_1 = arith.constant 0 : i32
    return %arg0, %c0_i32, %c0_i32_0 : i32, i32, i32
  }
  func.func @transform_10(%arg0: i32) -> (i32, i32, i32) {
    %c0_i32 = arith.constant 0 : i32
    %c0_i32_0 = arith.constant 0 : i32
    %c0_i32_1 = arith.constant 0 : i32
    return %arg0, %c0_i32, %c0_i32_0 : i32, i32, i32
  }
  func.func @transform_11(%arg0: i32) -> (i32, i32, i32) {
    %c0_i32 = arith.constant 0 : i32
    %c0_i32_0 = arith.constant 0 : i32
    %c0_i32_1 = arith.constant 0 : i32
    return %arg0, %c0_i32, %c0_i32_0 : i32, i32, i32
  }
  func.func @transform_12(%arg0: i32) -> (i32, i32, i32) {
    %c0_i32 = arith.constant 0 : i32
    %c0_i32_0 = arith.constant 0 : i32
    %c0_i32_1 = arith.constant 0 : i32
    return %arg0, %c0_i32, %c0_i32_0 : i32, i32, i32
  }
  func.func @transform_13(%arg0: i32) -> (i32, i32, i32) {
    %c0_i32 = arith.constant 0 : i32
    %c0_i32_0 = arith.constant 0 : i32
    %c0_i32_1 = arith.constant 0 : i32
    return %arg0, %c0_i32, %c0_i32_0 : i32, i32, i32
  }
  func.func @transform_14(%arg0: i32) -> (i32, i32, i32) {
    %c0_i32 = arith.constant 0 : i32
    %c0_i32_0 = arith.constant 0 : i32
    %c0_i32_1 = arith.constant 0 : i32
    return %arg0, %c0_i32, %c0_i32_0 : i32, i32, i32
  }
  func.func @transform_15(%arg0: i32) -> (i32, i32, i32) {
    %c0_i32 = arith.constant 0 : i32
    %c0_i32_0 = arith.constant 0 : i32
    %c0_i32_1 = arith.constant 0 : i32
    return %arg0, %c0_i32, %c0_i32_0 : i32, i32, i32
  }
  func.func @transform_16(%arg0: i32) -> (i32, i32, i32) {
    %c0_i32 = arith.constant 0 : i32
    %c0_i32_0 = arith.constant 0 : i32
    %c0_i32_1 = arith.constant 0 : i32
    return %arg0, %c0_i32, %c0_i32_0 : i32, i32, i32
  }
  func.func @transform_17(%arg0: i32) -> (i32, i32) {
    %c0_i32 = arith.constant 0 : i32
    %c0_i32_0 = arith.constant 0 : i32
    %c0_i32_1 = arith.constant 0 : i32
    return %c0_i32, %c0_i32_0 : i32, i32
  }
}

</mosaic_0001>

<llo_original>
// kernel: xlm_encoder_forward.1
$region0: #{xlm_encoder_forward.1}
  #allocation0 [shape = 'u32[]', space=smem, size = 0x4, offset = 0x4, fixed_abs, tag = 'smem constant byte address 0x4 - core index']
  #allocation1 [shape = 'u32[144,128]{1,0:T(1,128)}', space=vmem, size = 0x12000, scoped, tag = 'internal scratch']
  #allocation2 [shape = 'f32[16,32]{1,0:T(8,128)}', space=vmem, size = 0x2000, scoped, tag = 'scratch operand']
  %s0 = inlined_call_operand.vmem [shape: f32[16,32], index: 0, kind: input, shape index: {}]
  %s1 = inlined_call_operand.vmem [shape: f32[16,16], index: 1, kind: input, shape index: {}]
  %s2 = inlined_call_operand.vmem [shape: f32[16,1], index: 2, kind: input, shape index: {}]
  %s3 = inlined_call_operand.vmem [shape: f32[1,32], index: 3, kind: input, shape index: {}]
  %s4 = inlined_call_operand.vmem [shape: f32[1,32], index: 4, kind: input, shape index: {}]
  %s5 = inlined_call_operand.vmem [shape: bf16[2,32,96], index: 5, kind: input, shape index: {}]
  %s6 = inlined_call_operand.vmem [shape: f32[2,1,96], index: 6, kind: input, shape index: {}]
  %s7 = inlined_call_operand.vmem [shape: bf16[2,32,32], index: 7, kind: input, shape index: {}]
  %s8 = inlined_call_operand.vmem [shape: f32[2,1,32], index: 8, kind: input, shape index: {}]
  %s9 = inlined_call_operand.vmem [shape: f32[2,1,32], index: 9, kind: input, shape index: {}]
  %s10 = inlined_call_operand.vmem [shape: f32[2,1,32], index: 10, kind: input, shape index: {}]
  %s11 = inlined_call_operand.vmem [shape: bf16[2,32,128], index: 11, kind: input, shape index: {}]
  %s12 = inlined_call_operand.vmem [shape: f32[2,1,128], index: 12, kind: input, shape index: {}]
  %s13 = inlined_call_operand.vmem [shape: bf16[2,128,32], index: 13, kind: input, shape index: {}]
  %s14 = inlined_call_operand.vmem [shape: f32[2,1,32], index: 14, kind: input, shape index: {}]
  %s15 = inlined_call_operand.vmem [shape: f32[2,1,32], index: 15, kind: input, shape index: {}]
  %s16 = inlined_call_operand.vmem [shape: f32[2,1,32], index: 16, kind: input, shape index: {}]
  %s17 = inlined_call_operand.hbm [shape: f32[16,32], index: 17, kind: output, shape index: {}]
  %s18 = sld [smem:[#allocation0]]
  $region105: #{xlm_encoder_forward.1} parent=0
    _
  %s20 = ssub.s32 1, %s18
  %s21 = scalar_select 0, %s20, %s18
  $region1: #{xlm_encoder_forward.1} parent=0
    #allocation3 [shape = 'u8[8192]{0}', space=vmem, size = 0x2000, scoped, tag = 'output window, operand 0, single buffered']
    #allocation4 [shape = 's32[2]{0}', space=sflag, size = 0x8, scoped, tag = 'scoped memory for xlm_encoder_forward.1']
    %22 = vsyncpa [#allocation4], 0
    loop: start=0, step=1, limit=4
    $region2: #{xlm_encoder_forward.1} parent=1 // loop_pre_header
      _
    $region3: #{xlm_encoder_forward.1} parent=1 // loop_header
      %s24 = sphi 0, %s28
      %p25 = scmp.ge.s32.totalorder %s24, 4
      %s32 = sphi 0, %s32
      %s34 = sphi 0, %s32
      %s35 = sphi 0, %s34
      %s49 = sphi 0, %s35
      %s53 = sphi 0, %s53
      %s55 = sphi 0, %s53
      %s56 = sphi 0, %s55
      %s70 = sphi 0, %s56
      %s74 = sphi 0, %s74
      %s76 = sphi 0, %s74
      %s77 = sphi 0, %s76
      %s91 = sphi 0, %s77
      %s95 = sphi 0, %s95
      %s97 = sphi 0, %s95
      %s98 = sphi 0, %s97
      %s112 = sphi 0, %s98
      %s116 = sphi 0, %s116
      %s118 = sphi 0, %s116
      %s119 = sphi 0, %s118
      %s133 = sphi 0, %s119
      %s139 = sphi 0, %s141
      %s142 = sphi 0, %s139
      %s143 = sphi 0, %s142
      %s159 = sphi 0, %s143
      %s165 = sphi 0, %s167
      %s168 = sphi 0, %s165
      %s169 = sphi 0, %s168
      %s185 = sphi 0, %s169
      %s191 = sphi 0, %s193
      %s194 = sphi 0, %s191
      %s195 = sphi 0, %s194
      %s211 = sphi 0, %s195
      %s217 = sphi 0, %s219
      %s220 = sphi 0, %s217
      %s221 = sphi 0, %s220
      %s237 = sphi 0, %s221
      %s243 = sphi 0, %s245
      %s246 = sphi 0, %s243
      %s247 = sphi 0, %s246
      %s263 = sphi 0, %s247
      %s269 = sphi 0, %s271
      %s272 = sphi 0, %s269
      %s273 = sphi 0, %s272
      %s289 = sphi 0, %s273
      %s295 = sphi 0, %s297
      %s298 = sphi 0, %s295
      %s299 = sphi 0, %s298
      %s315 = sphi 0, %s299
      %s321 = sphi 0, %s323
      %s324 = sphi 0, %s321
      %s325 = sphi 0, %s324
      %s341 = sphi 0, %s325
      %s347 = sphi 0, %s349
      %s350 = sphi 0, %s347
      %s351 = sphi 0, %s350
      %s367 = sphi 0, %s351
      %s373 = sphi 0, %s375
      %s376 = sphi 0, %s373
      %s377 = sphi 0, %s376
      %s393 = sphi 0, %s377
      %s399 = sphi 0, %s401
      %s402 = sphi 0, %s399
      %s403 = sphi 0, %s402
      %s419 = sphi 0, %s403
      %s425 = sphi 0, %s427
      %s428 = sphi 0, %s425
      %s429 = sphi 0, %s428
      %s445 = sphi 0, %s429
      %s449 = sphi 0, %s449
      %s451 = sphi 0, %s449
      %s452 = sphi 0, %s451
      %s466 = sphi 0, %s452
    $region4: #{xlm_encoder_forward.1} parent=1 // loop_header_branch
      %27 = sbr.rel (%p25) target = $region8
    $region5: #{xlm_encoder_forward.1} parent=1 // loop_body
      %s29 = ssub.s32 %s24, 1
      %s30 = ssub.s32 %s24, 2
      %s31 = sadd.s32 %s24, 1
      %s33 = sadd.s32 %s32, 1
      %p36 = scmp.eq.s32.totalorder %s24, 1
      %p37 = scmp.ne.s32.totalorder %s32, %s34
      %p38 = scmp.eq.s32.totalorder %s24, 0
      %p39 = por %p37, %p38
      %p40 = scmp.ne.s32.totalorder %s32, %s34
      %p41 = scmp.eq.s32.totalorder %s29, 1
      %p42 = por %p40, %p41
      %p43 = scmp.ne.s32.totalorder %s34, %s35
      %p44 = scmp.eq.s32.totalorder %s29, 0
      %p45 = por %p43, %p44
      %p46 = scmp.ne.s32.totalorder %s34, %s35
      %p47 = scmp.eq.s32.totalorder %s30, 1
      %p48 = por %p46, %p47
      %p50 = scmp.ne.s32.totalorder %s35, %s49
      %p51 = scmp.eq.s32.totalorder %s30, 0
      %p52 = por %p50, %p51
      %s54 = sadd.s32 %s53, 1
      %p57 = scmp.eq.s32.totalorder %s24, 1
      %p58 = scmp.ne.s32.totalorder %s53, %s55
      %p59 = scmp.eq.s32.totalorder %s24, 0
      %p60 = por %p58, %p59
      %p61 = scmp.ne.s32.totalorder %s53, %s55
      %p62 = scmp.eq.s32.totalorder %s29, 1
      %p63 = por %p61, %p62
      %p64 = scmp.ne.s32.totalorder %s55, %s56
      %p65 = scmp.eq.s32.totalorder %s29, 0
      %p66 = por %p64, %p65
      %p67 = scmp.ne.s32.totalorder %s55, %s56
      %p68 = scmp.eq.s32.totalorder %s30, 1
      %p69 = por %p67, %p68
      %p71 = scmp.ne.s32.totalorder %s56, %s70
      %p72 = scmp.eq.s32.totalorder %s30, 0
      %p73 = por %p71, %p72
      %s75 = sadd.s32 %s74, 1
      %p78 = scmp.eq.s32.totalorder %s24, 1
      %p79 = scmp.ne.s32.totalorder %s74, %s76
      %p80 = scmp.eq.s32.totalorder %s24, 0
      %p81 = por %p79, %p80
      %p82 = scmp.ne.s32.totalorder %s74, %s76
      %p83 = scmp.eq.s32.totalorder %s29, 1
      %p84 = por %p82, %p83
      %p85 = scmp.ne.s32.totalorder %s76, %s77
      %p86 = scmp.eq.s32.totalorder %s29, 0
      %p87 = por %p85, %p86
      %p88 = scmp.ne.s32.totalorder %s76, %s77
      %p89 = scmp.eq.s32.totalorder %s30, 1
      %p90 = por %p88, %p89
      %p92 = scmp.ne.s32.totalorder %s77, %s91
      %p93 = scmp.eq.s32.totalorder %s30, 0
      %p94 = por %p92, %p93
      %s96 = sadd.s32 %s95, 1
      %p99 = scmp.eq.s32.totalorder %s24, 1
      %p100 = scmp.ne.s32.totalorder %s95, %s97
      %p101 = scmp.eq.s32.totalorder %s24, 0
      %p102 = por %p100, %p101
      %p103 = scmp.ne.s32.totalorder %s95, %s97
      %p104 = scmp.eq.s32.totalorder %s29, 1
      %p105 = por %p103, %p104
      %p106 = scmp.ne.s32.totalorder %s97, %s98
      %p107 = scmp.eq.s32.totalorder %s29, 0
      %p108 = por %p106, %p107
      %p109 = scmp.ne.s32.totalorder %s97, %s98
      %p110 = scmp.eq.s32.totalorder %s30, 1
      %p111 = por %p109, %p110
      %p113 = scmp.ne.s32.totalorder %s98, %s112
      %p114 = scmp.eq.s32.totalorder %s30, 0
      %p115 = por %p113, %p114
      %s117 = sadd.s32 %s116, 1
      %p120 = scmp.eq.s32.totalorder %s24, 1
      %p121 = scmp.ne.s32.totalorder %s116, %s118
      %p122 = scmp.eq.s32.totalorder %s24, 0
      %p123 = por %p121, %p122
      %p124 = scmp.ne.s32.totalorder %s116, %s118
      %p125 = scmp.eq.s32.totalorder %s29, 1
      %p126 = por %p124, %p125
      %p127 = scmp.ne.s32.totalorder %s118, %s119
      %p128 = scmp.eq.s32.totalorder %s29, 0
      %p129 = por %p127, %p128
      %p130 = scmp.ne.s32.totalorder %s118, %s119
      %p131 = scmp.eq.s32.totalorder %s30, 1
      %p132 = por %p130, %p131
      %p134 = scmp.ne.s32.totalorder %s119, %s133
      %p135 = scmp.eq.s32.totalorder %s30, 0
      %p136 = por %p134, %p135
      %s137 = ssub.s32 %s24, %s31
      %p138 = scmp.eq.s32.totalorder %s137, 0
      %s140 = sadd.s32 %s139, 1
      %s141 = scalar_select %p138, %s139, %s140
      %p144 = pneg %p138
      %p145 = scmp.eq.s32.totalorder %s24, 1
      %p146 = por %p144, %p145
      %p147 = scmp.ne.s32.totalorder %s139, %s142
      %p148 = scmp.eq.s32.totalorder %s24, 0
      %p149 = por %p147, %p148
      %p150 = scmp.ne.s32.totalorder %s139, %s142
      %p151 = scmp.eq.s32.totalorder %s29, 1
      %p152 = por %p150, %p151
      %p153 = scmp.ne.s32.totalorder %s142, %s143
      %p154 = scmp.eq.s32.totalorder %s29, 0
      %p155 = por %p153, %p154
      %p156 = scmp.ne.s32.totalorder %s142, %s143
      %p157 = scmp.eq.s32.totalorder %s30, 1
      %p158 = por %p156, %p157
      %p160 = scmp.ne.s32.totalorder %s143, %s159
      %p161 = scmp.eq.s32.totalorder %s30, 0
      %p162 = por %p160, %p161
      %s163 = ssub.s32 %s24, %s31
      %p164 = scmp.eq.s32.totalorder %s163, 0
      %s166 = sadd.s32 %s165, 1
      %s167 = scalar_select %p164, %s165, %s166
      %p170 = pneg %p164
      %p171 = scmp.eq.s32.totalorder %s24, 1
      %p172 = por %p170, %p171
      %p173 = scmp.ne.s32.totalorder %s165, %s168
      %p174 = scmp.eq.s32.totalorder %s24, 0
      %p175 = por %p173, %p174
      %p176 = scmp.ne.s32.totalorder %s165, %s168
      %p177 = scmp.eq.s32.totalorder %s29, 1
      %p178 = por %p176, %p177
      %p179 = scmp.ne.s32.totalorder %s168, %s169
      %p180 = scmp.eq.s32.totalorder %s29, 0
      %p181 = por %p179, %p180
      %p182 = scmp.ne.s32.totalorder %s168, %s169
      %p183 = scmp.eq.s32.totalorder %s30, 1
      %p184 = por %p182, %p183
      %p186 = scmp.ne.s32.totalorder %s169, %s185
      %p187 = scmp.eq.s32.totalorder %s30, 0
      %p188 = por %p186, %p187
      %s189 = ssub.s32 %s24, %s31
      %p190 = scmp.eq.s32.totalorder %s189, 0
      %s192 = sadd.s32 %s191, 1
      %s193 = scalar_select %p190, %s191, %s192
      %p196 = pneg %p190
      %p197 = scmp.eq.s32.totalorder %s24, 1
      %p198 = por %p196, %p197
      %p199 = scmp.ne.s32.totalorder %s191, %s194
      %p200 = scmp.eq.s32.totalorder %s24, 0
      %p201 = por %p199, %p200
      %p202 = scmp.ne.s32.totalorder %s191, %s194
      %p203 = scmp.eq.s32.totalorder %s29, 1
      %p204 = por %p202, %p203
      %p205 = scmp.ne.s32.totalorder %s194, %s195
      %p206 = scmp.eq.s32.totalorder %s29, 0
      %p207 = por %p205, %p206
      %p208 = scmp.ne.s32.totalorder %s194, %s195
      %p209 = scmp.eq.s32.totalorder %s30, 1
      %p210 = por %p208, %p209
      %p212 = scmp.ne.s32.totalorder %s195, %s211
      %p213 = scmp.eq.s32.totalorder %s30, 0
      %p214 = por %p212, %p213
      %s215 = ssub.s32 %s24, %s31
      %p216 = scmp.eq.s32.totalorder %s215, 0
      %s218 = sadd.s32 %s217, 1
      %s219 = scalar_select %p216, %s217, %s218
      %p222 = pneg %p216
      %p223 = scmp.eq.s32.totalorder %s24, 1
      %p224 = por %p222, %p223
      %p225 = scmp.ne.s32.totalorder %s217, %s220
      %p226 = scmp.eq.s32.totalorder %s24, 0
      %p227 = por %p225, %p226
      %p228 = scmp.ne.s32.totalorder %s217, %s220
      %p229 = scmp.eq.s32.totalorder %s29, 1
      %p230 = por %p228, %p229
      %p231 = scmp.ne.s32.totalorder %s220, %s221
      %p232 = scmp.eq.s32.totalorder %s29, 0
      %p233 = por %p231, %p232
      %p234 = scmp.ne.s32.totalorder %s220, %s221
      %p235 = scmp.eq.s32.totalorder %s30, 1
      %p236 = por %p234, %p235
      %p238 = scmp.ne.s32.totalorder %s221, %s237
      %p239 = scmp.eq.s32.totalorder %s30, 0
      %p240 = por %p238, %p239
      %s241 = ssub.s32 %s24, %s31
      %p242 = scmp.eq.s32.totalorder %s241, 0
      %s244 = sadd.s32 %s243, 1
      %s245 = scalar_select %p242, %s243, %s244
      %p248 = pneg %p242
      %p249 = scmp.eq.s32.totalorder %s24, 1
      %p250 = por %p248, %p249
      %p251 = scmp.ne.s32.totalorder %s243, %s246
      %p252 = scmp.eq.s32.totalorder %s24, 0
      %p253 = por %p251, %p252
      %p254 = scmp.ne.s32.totalorder %s243, %s246
      %p255 = scmp.eq.s32.totalorder %s29, 1
      %p256 = por %p254, %p255
      %p257 = scmp.ne.s32.totalorder %s246, %s247
      %p258 = scmp.eq.s32.totalorder %s29, 0
      %p259 = por %p257, %p258
      %p260 = scmp.ne.s32.totalorder %s246, %s247
      %p261 = scmp.eq.s32.totalorder %s30, 1
      %p262 = por %p260, %p261
      %p264 = scmp.ne.s32.totalorder %s247, %s263
      %p265 = scmp.eq.s32.totalorder %s30, 0
      %p266 = por %p264, %p265
      %s267 = ssub.s32 %s24, %s31
      %p268 = scmp.eq.s32.totalorder %s267, 0
      %s270 = sadd.s32 %s269, 1
      %s271 = scalar_select %p268, %s269, %s270
      %p274 = pneg %p268
      %p275 = scmp.eq.s32.totalorder %s24, 1
      %p276 = por %p274, %p275
      %p277 = scmp.ne.s32.totalorder %s269, %s272
      %p278 = scmp.eq.s32.totalorder %s24, 0
      %p279 = por %p277, %p278
      %p280 = scmp.ne.s32.totalorder %s269, %s272
      %p281 = scmp.eq.s32.totalorder %s29, 1
      %p282 = por %p280, %p281
      %p283 = scmp.ne.s32.totalorder %s272, %s273
      %p284 = scmp.eq.s32.totalorder %s29, 0
      %p285 = por %p283, %p284
      %p286 = scmp.ne.s32.totalorder %s272, %s273
      %p287 = scmp.eq.s32.totalorder %s30, 1
      %p288 = por %p286, %p287
      %p290 = scmp.ne.s32.totalorder %s273, %s289
      %p291 = scmp.eq.s32.totalorder %s30, 0
      %p292 = por %p290, %p291
      %s293 = ssub.s32 %s24, %s31
      %p294 = scmp.eq.s32.totalorder %s293, 0
      %s296 = sadd.s32 %s295, 1
      %s297 = scalar_select %p294, %s295, %s296
      %p300 = pneg %p294
      %p301 = scmp.eq.s32.totalorder %s24, 1
      %p302 = por %p300, %p301
      %p303 = scmp.ne.s32.totalorder %s295, %s298
      %p304 = scmp.eq.s32.totalorder %s24, 0
      %p305 = por %p303, %p304
      %p306 = scmp.ne.s32.totalorder %s295, %s298
      %p307 = scmp.eq.s32.totalorder %s29, 1
      %p308 = por %p306, %p307
      %p309 = scmp.ne.s32.totalorder %s298, %s299
      %p310 = scmp.eq.s32.totalorder %s29, 0
      %p311 = por %p309, %p310
      %p312 = scmp.ne.s32.totalorder %s298, %s299
      %p313 = scmp.eq.s32.totalorder %s30, 1
      %p314 = por %p312, %p313
      %p316 = scmp.ne.s32.totalorder %s299, %s315
      %p317 = scmp.eq.s32.totalorder %s30, 0
      %p318 = por %p316, %p317
      %s319 = ssub.s32 %s24, %s31
      %p320 = scmp.eq.s32.totalorder %s319, 0
      %s322 = sadd.s32 %s321, 1
      %s323 = scalar_select %p320, %s321, %s322
      %p326 = pneg %p320
      %p327 = scmp.eq.s32.totalorder %s24, 1
      %p328 = por %p326, %p327
      %p329 = scmp.ne.s32.totalorder %s321, %s324
      %p330 = scmp.eq.s32.totalorder %s24, 0
      %p331 = por %p329, %p330
      %p332 = scmp.ne.s32.totalorder %s321, %s324
      %p333 = scmp.eq.s32.totalorder %s29, 1
      %p334 = por %p332, %p333
      %p335 = scmp.ne.s32.totalorder %s324, %s325
      %p336 = scmp.eq.s32.totalorder %s29, 0
      %p337 = por %p335, %p336
      %p338 = scmp.ne.s32.totalorder %s324, %s325
      %p339 = scmp.eq.s32.totalorder %s30, 1
      %p340 = por %p338, %p339
      %p342 = scmp.ne.s32.totalorder %s325, %s341
      %p343 = scmp.eq.s32.totalorder %s30, 0
      %p344 = por %p342, %p343
      %s345 = ssub.s32 %s24, %s31
      %p346 = scmp.eq.s32.totalorder %s345, 0
      %s348 = sadd.s32 %s347, 1
      %s349 = scalar_select %p346, %s347, %s348
      %p352 = pneg %p346
      %p353 = scmp.eq.s32.totalorder %s24, 1
      %p354 = por %p352, %p353
      %p355 = scmp.ne.s32.totalorder %s347, %s350
      %p356 = scmp.eq.s32.totalorder %s24, 0
      %p357 = por %p355, %p356
      %p358 = scmp.ne.s32.totalorder %s347, %s350
      %p359 = scmp.eq.s32.totalorder %s29, 1
      %p360 = por %p358, %p359
      %p361 = scmp.ne.s32.totalorder %s350, %s351
      %p362 = scmp.eq.s32.totalorder %s29, 0
      %p363 = por %p361, %p362
      %p364 = scmp.ne.s32.totalorder %s350, %s351
      %p365 = scmp.eq.s32.totalorder %s30, 1
      %p366 = por %p364, %p365
      %p368 = scmp.ne.s32.totalorder %s351, %s367
      %p369 = scmp.eq.s32.totalorder %s30, 0
      %p370 = por %p368, %p369
      %s371 = ssub.s32 %s24, %s31
      %p372 = scmp.eq.s32.totalorder %s371, 0
      %s374 = sadd.s32 %s373, 1
      %s375 = scalar_select %p372, %s373, %s374
      %p378 = pneg %p372
      %p379 = scmp.eq.s32.totalorder %s24, 1
      %p380 = por %p378, %p379
      %p381 = scmp.ne.s32.totalorder %s373, %s376
      %p382 = scmp.eq.s32.totalorder %s24, 0
      %p383 = por %p381, %p382
      %p384 = scmp.ne.s32.totalorder %s373, %s376
      %p385 = scmp.eq.s32.totalorder %s29, 1
      %p386 = por %p384, %p385
      %p387 = scmp.ne.s32.totalorder %s376, %s377
      %p388 = scmp.eq.s32.totalorder %s29, 0
      %p389 = por %p387, %p388
      %p390 = scmp.ne.s32.totalorder %s376, %s377
      %p391 = scmp.eq.s32.totalorder %s30, 1
      %p392 = por %p390, %p391
      %p394 = scmp.ne.s32.totalorder %s377, %s393
      %p395 = scmp.eq.s32.totalorder %s30, 0
      %p396 = por %p394, %p395
      %s397 = ssub.s32 %s24, %s31
      %p398 = scmp.eq.s32.totalorder %s397, 0
      %s400 = sadd.s32 %s399, 1
      %s401 = scalar_select %p398, %s399, %s400
      %p404 = pneg %p398
      %p405 = scmp.eq.s32.totalorder %s24, 1
      %p406 = por %p404, %p405
      %p407 = scmp.ne.s32.totalorder %s399, %s402
      %p408 = scmp.eq.s32.totalorder %s24, 0
      %p409 = por %p407, %p408
      %p410 = scmp.ne.s32.totalorder %s399, %s402
      %p411 = scmp.eq.s32.totalorder %s29, 1
      %p412 = por %p410, %p411
      %p413 = scmp.ne.s32.totalorder %s402, %s403
      %p414 = scmp.eq.s32.totalorder %s29, 0
      %p415 = por %p413, %p414
      %p416 = scmp.ne.s32.totalorder %s402, %s403
      %p417 = scmp.eq.s32.totalorder %s30, 1
      %p418 = por %p416, %p417
      %p420 = scmp.ne.s32.totalorder %s403, %s419
      %p421 = scmp.eq.s32.totalorder %s30, 0
      %p422 = por %p420, %p421
      %s423 = ssub.s32 %s24, %s31
      %p424 = scmp.eq.s32.totalorder %s423, 0
      %s426 = sadd.s32 %s425, 1
      %s427 = scalar_select %p424, %s425, %s426
      %p430 = pneg %p424
      %p431 = scmp.eq.s32.totalorder %s24, 1
      %p432 = por %p430, %p431
      %p433 = scmp.ne.s32.totalorder %s425, %s428
      %p434 = scmp.eq.s32.totalorder %s24, 0
      %p435 = por %p433, %p434
      %p436 = scmp.ne.s32.totalorder %s425, %s428
      %p437 = scmp.eq.s32.totalorder %s29, 1
      %p438 = por %p436, %p437
      %p439 = scmp.ne.s32.totalorder %s428, %s429
      %p440 = scmp.eq.s32.totalorder %s29, 0
      %p441 = por %p439, %p440
      %p442 = scmp.ne.s32.totalorder %s428, %s429
      %p443 = scmp.eq.s32.totalorder %s30, 1
      %p444 = por %p442, %p443
      %p446 = scmp.ne.s32.totalorder %s429, %s445
      %p447 = scmp.eq.s32.totalorder %s30, 0
      %p448 = por %p446, %p447
      %s450 = sadd.s32 %s449, 1
      %p453 = scmp.eq.s32.totalorder %s24, 1
      %p454 = scmp.ne.s32.totalorder %s449, %s451
      %p455 = scmp.eq.s32.totalorder %s24, 0
      %p456 = por %p454, %p455
      %p457 = scmp.ne.s32.totalorder %s449, %s451
      %p458 = scmp.eq.s32.totalorder %s29, 1
      %p459 = por %p457, %p458
      %p460 = scmp.ne.s32.totalorder %s451, %s452
      %p461 = scmp.eq.s32.totalorder %s29, 0
      %p462 = por %p460, %p461
      %p463 = scmp.ne.s32.totalorder %s451, %s452
      %p464 = scmp.eq.s32.totalorder %s30, 1
      %p465 = por %p463, %p464
      %p467 = scmp.ne.s32.totalorder %s452, %s466
      %p468 = scmp.eq.s32.totalorder %s30, 0
      %p469 = por %p467, %p468
      %p470 = scmp.le.s32.totalorder 1, %s24
      %p471 = scmp.lt.s32.totalorder %s24, 3
      %p472 = pnand %p470, %p471
      %p473 = pneg %p472
      // Predicated region
      $region9: #{xlm_encoder_forward.1} parent=5 // pred_check
        _
      $region10: #{xlm_encoder_forward.1} parent=5 // pred_check_branch
        %475 = sbr.rel (%p472) target = $region12
      $region11: #{xlm_encoder_forward.1} parent=5 // pred_region
        %s476 = ssub.s32 %s24, 1
        // Predicated region
        $region13: #{xlm_encoder_forward.1} parent=11 // pred_check
          %p477 = pneg %p45
        $region14: #{xlm_encoder_forward.1} parent=11 // pred_check_branch
          %479 = sbr.rel (%p477) target = $region16
        $region15: #{xlm_encoder_forward.1} parent=11 // pred_region
          _
        $region16: #{xlm_encoder_forward.1} parent=11 // pred_fallthru
          _
        // Predicated region
        $region17: #{xlm_encoder_forward.1} parent=11 // pred_check
          %p480 = pneg %p66
        $region18: #{xlm_encoder_forward.1} parent=11 // pred_check_branch
          %482 = sbr.rel (%p480) target = $region20
        $region19: #{xlm_encoder_forward.1} parent=11 // pred_region
          _
        $region20: #{xlm_encoder_forward.1} parent=11 // pred_fallthru
          _
        // Predicated region
        $region21: #{xlm_encoder_forward.1} parent=11 // pred_check
          %p483 = pneg %p87
        $region22: #{xlm_encoder_forward.1} parent=11 // pred_check_branch
          %485 = sbr.rel (%p483) target = $region24
        $region23: #{xlm_encoder_forward.1} parent=11 // pred_region
          _
        $region24: #{xlm_encoder_forward.1} parent=11 // pred_fallthru
          _
        // Predicated region
        $region25: #{xlm_encoder_forward.1} parent=11 // pred_check
          %p486 = pneg %p108
        $region26: #{xlm_encoder_forward.1} parent=11 // pred_check_branch
          %488 = sbr.rel (%p486) target = $region28
        $region27: #{xlm_encoder_forward.1} parent=11 // pred_region
          _
        $region28: #{xlm_encoder_forward.1} parent=11 // pred_fallthru
          _
        // Predicated region
        $region29: #{xlm_encoder_forward.1} parent=11 // pred_check
          %p489 = pneg %p129
        $region30: #{xlm_encoder_forward.1} parent=11 // pred_check_branch
          %491 = sbr.rel (%p489) target = $region32
        $region31: #{xlm_encoder_forward.1} parent=11 // pred_region
          _
        $region32: #{xlm_encoder_forward.1} parent=11 // pred_fallthru
          _
      $region12: #{xlm_encoder_forward.1} parent=5 // pred_fallthru
        _
      %p492 = scmp.lt.s32.totalorder %s24, 2
      // Predicated region
      $region33: #{xlm_encoder_forward.1} parent=5 // pred_check
        %p493 = pneg %p492
      $region34: #{xlm_encoder_forward.1} parent=5 // pred_check_branch
        %495 = sbr.rel (%p493) target = $region36
      $region35: #{xlm_encoder_forward.1} parent=5 // pred_region
        // Predicated region
        $region37: #{xlm_encoder_forward.1} parent=35 // pred_check
          %p496 = pneg %p149
        $region38: #{xlm_encoder_forward.1} parent=35 // pred_check_branch
          %498 = sbr.rel (%p496) target = $region40
        $region39: #{xlm_encoder_forward.1} parent=35 // pred_region
          %p499 = scmp.lt.s32.totalorder %s24, 1
          %s500 = scalar_select %p499, %s24, 1
          %s501 = smul.addr %s500, 4
          %s502 = smul.addr %s501, 4
          %s503 = scalar_lea.vmem %s5, %s502
        $region40: #{xlm_encoder_forward.1} parent=35 // pred_fallthru
          _
        // Predicated region
        $region41: #{xlm_encoder_forward.1} parent=35 // pred_check
          %p504 = pneg %p175
        $region42: #{xlm_encoder_forward.1} parent=35 // pred_check_branch
          %506 = sbr.rel (%p504) target = $region44
        $region43: #{xlm_encoder_forward.1} parent=35 // pred_region
          %p507 = scmp.lt.s32.totalorder %s24, 1
          %s508 = scalar_select %p507, %s24, 1
          %s509 = scalar_lea.vmem %s6, %s508
        $region44: #{xlm_encoder_forward.1} parent=35 // pred_fallthru
          _
        // Predicated region
        $region45: #{xlm_encoder_forward.1} parent=35 // pred_check
          %p510 = pneg %p201
        $region46: #{xlm_encoder_forward.1} parent=35 // pred_check_branch
          %512 = sbr.rel (%p510) target = $region48
        $region47: #{xlm_encoder_forward.1} parent=35 // pred_region
          %p513 = scmp.lt.s32.totalorder %s24, 1
          %s514 = scalar_select %p513, %s24, 1
          %s515 = smul.addr %s514, 4
          %s516 = smul.addr %s515, 4
          %s517 = scalar_lea.vmem %s7, %s516
        $region48: #{xlm_encoder_forward.1} parent=35 // pred_fallthru
          _
        // Predicated region
        $region49: #{xlm_encoder_forward.1} parent=35 // pred_check
          %p518 = pneg %p227
        $region50: #{xlm_encoder_forward.1} parent=35 // pred_check_branch
          %520 = sbr.rel (%p518) target = $region52
        $region51: #{xlm_encoder_forward.1} parent=35 // pred_region
          %p521 = scmp.lt.s32.totalorder %s24, 1
          %s522 = scalar_select %p521, %s24, 1
          %s523 = scalar_lea.vmem %s8, %s522
        $region52: #{xlm_encoder_forward.1} parent=35 // pred_fallthru
          _
        // Predicated region
        $region53: #{xlm_encoder_forward.1} parent=35 // pred_check
          %p524 = pneg %p253
        $region54: #{xlm_encoder_forward.1} parent=35 // pred_check_branch
          %526 = sbr.rel (%p524) target = $region56
        $region55: #{xlm_encoder_forward.1} parent=35 // pred_region
          %p527 = scmp.lt.s32.totalorder %s24, 1
          %s528 = scalar_select %p527, %s24, 1
          %s529 = scalar_lea.vmem %s9, %s528
        $region56: #{xlm_encoder_forward.1} parent=35 // pred_fallthru
          _
        // Predicated region
        $region57: #{xlm_encoder_forward.1} parent=35 // pred_check
          %p530 = pneg %p279
        $region58: #{xlm_encoder_forward.1} parent=35 // pred_check_branch
          %532 = sbr.rel (%p530) target = $region60
        $region59: #{xlm_encoder_forward.1} parent=35 // pred_region
          %p533 = scmp.lt.s32.totalorder %s24, 1
          %s534 = scalar_select %p533, %s24, 1
          %s535 = scalar_lea.vmem %s10, %s534
        $region60: #{xlm_encoder_forward.1} parent=35 // pred_fallthru
          _
        // Predicated region
        $region61: #{xlm_encoder_forward.1} parent=35 // pred_check
          %p536 = pneg %p305
        $region62: #{xlm_encoder_forward.1} parent=35 // pred_check_branch
          %538 = sbr.rel (%p536) target = $region64
        $region63: #{xlm_encoder_forward.1} parent=35 // pred_region
          %p539 = scmp.lt.s32.totalorder %s24, 1
          %s540 = scalar_select %p539, %s24, 1
          %s541 = smul.addr %s540, 4
          %s542 = smul.addr %s541, 4
          %s543 = scalar_lea.vmem %s11, %s542
        $region64: #{xlm_encoder_forward.1} parent=35 // pred_fallthru
          _
        // Predicated region
        $region65: #{xlm_encoder_forward.1} parent=35 // pred_check
          %p544 = pneg %p331
        $region66: #{xlm_encoder_forward.1} parent=35 // pred_check_branch
          %546 = sbr.rel (%p544) target = $region68
        $region67: #{xlm_encoder_forward.1} parent=35 // pred_region
          %p547 = scmp.lt.s32.totalorder %s24, 1
          %s548 = scalar_select %p547, %s24, 1
          %s549 = scalar_lea.vmem %s12, %s548
        $region68: #{xlm_encoder_forward.1} parent=35 // pred_fallthru
          _
        // Predicated region
        $region69: #{xlm_encoder_forward.1} parent=35 // pred_check
          %p550 = pneg %p357
        $region70: #{xlm_encoder_forward.1} parent=35 // pred_check_branch
          %552 = sbr.rel (%p550) target = $region72
        $region71: #{xlm_encoder_forward.1} parent=35 // pred_region
          %p553 = scmp.lt.s32.totalorder %s24, 1
          %s554 = scalar_select %p553, %s24, 1
          %s555 = smul.addr %s554, 16
          %s556 = smul.addr %s555, 4
          %s557 = scalar_lea.vmem %s13, %s556
        $region72: #{xlm_encoder_forward.1} parent=35 // pred_fallthru
          _
        // Predicated region
        $region73: #{xlm_encoder_forward.1} parent=35 // pred_check
          %p558 = pneg %p383
        $region74: #{xlm_encoder_forward.1} parent=35 // pred_check_branch
          %560 = sbr.rel (%p558) target = $region76
        $region75: #{xlm_encoder_forward.1} parent=35 // pred_region
          %p561 = scmp.lt.s32.totalorder %s24, 1
          %s562 = scalar_select %p561, %s24, 1
          %s563 = scalar_lea.vmem %s14, %s562
        $region76: #{xlm_encoder_forward.1} parent=35 // pred_fallthru
          _
        // Predicated region
        $region77: #{xlm_encoder_forward.1} parent=35 // pred_check
          %p564 = pneg %p409
        $region78: #{xlm_encoder_forward.1} parent=35 // pred_check_branch
          %566 = sbr.rel (%p564) target = $region80
        $region79: #{xlm_encoder_forward.1} parent=35 // pred_region
          %p567 = scmp.lt.s32.totalorder %s24, 1
          %s568 = scalar_select %p567, %s24, 1
          %s569 = scalar_lea.vmem %s15, %s568
        $region80: #{xlm_encoder_forward.1} parent=35 // pred_fallthru
          _
        // Predicated region
        $region81: #{xlm_encoder_forward.1} parent=35 // pred_check
          %p570 = pneg %p435
        $region82: #{xlm_encoder_forward.1} parent=35 // pred_check_branch
          %572 = sbr.rel (%p570) target = $region84
        $region83: #{xlm_encoder_forward.1} parent=35 // pred_region
          %p573 = scmp.lt.s32.totalorder %s24, 1
          %s574 = scalar_select %p573, %s24, 1
          %s575 = scalar_lea.vmem %s16, %s574
        $region84: #{xlm_encoder_forward.1} parent=35 // pred_fallthru
          _
      $region36: #{xlm_encoder_forward.1} parent=5 // pred_fallthru
        _
      %p576 = scmp.le.s32.totalorder 1, %s24
      %p577 = scmp.lt.s32.totalorder %s24, 3
      %p578 = pnand %p576, %p577
      %p579 = pneg %p578
      // Predicated region
      $region85: #{xlm_encoder_forward.1} parent=5 // pred_check
        _
      $region86: #{xlm_encoder_forward.1} parent=5 // pred_check_branch
        %581 = sbr.rel (%p578) target = $region88
      $region87: #{xlm_encoder_forward.1} parent=5 // pred_region
        %s582 = ssub.s32 %s24, 1
        %p583 = pneg %p45
        %p584 = pneg %p42
        %p585 = pneg %p66
        %p586 = pneg %p63
        %p587 = pneg %p87
        %p588 = pneg %p84
        %p589 = pneg %p108
        %p590 = pneg %p105
        %p591 = pneg %p129
        %p592 = pneg %p126
        %p593 = scmp.lt.s32.totalorder %s29, 1
        %s594 = scalar_select %p593, %s29, 1
        %s595 = smul.addr %s594, 4
        %s596 = smul.addr %s595, 4
        %s597 = scalar_lea.vmem %s5, %s596
        %p598 = pneg %p155
        %p599 = pneg %p152
        %p600 = scmp.lt.s32.totalorder %s29, 1
        %s601 = scalar_select %p600, %s29, 1
        %s602 = scalar_lea.vmem %s6, %s601
        %p603 = pneg %p181
        %p604 = pneg %p178
        %p605 = scmp.lt.s32.totalorder %s29, 1
        %s606 = scalar_select %p605, %s29, 1
        %s607 = smul.addr %s606, 4
        %s608 = smul.addr %s607, 4
        %s609 = scalar_lea.vmem %s7, %s608
        %p610 = pneg %p207
        %p611 = pneg %p204
        %p612 = scmp.lt.s32.totalorder %s29, 1
        %s613 = scalar_select %p612, %s29, 1
        %s614 = scalar_lea.vmem %s8, %s613
        %p615 = pneg %p233
        %p616 = pneg %p230
        %p617 = scmp.lt.s32.totalorder %s29, 1
        %s618 = scalar_select %p617, %s29, 1
        %s619 = scalar_lea.vmem %s9, %s618
        %p620 = pneg %p259
        %p621 = pneg %p256
        %p622 = scmp.lt.s32.totalorder %s29, 1
        %s623 = scalar_select %p622, %s29, 1
        %s624 = scalar_lea.vmem %s10, %s623
        %p625 = pneg %p285
        %p626 = pneg %p282
        %p627 = scmp.lt.s32.totalorder %s29, 1
        %s628 = scalar_select %p627, %s29, 1
        %s629 = smul.addr %s628, 4
        %s630 = smul.addr %s629, 4
        %s631 = scalar_lea.vmem %s11, %s630
        %p632 = pneg %p311
        %p633 = pneg %p308
        %p634 = scmp.lt.s32.totalorder %s29, 1
        %s635 = scalar_select %p634, %s29, 1
        %s636 = scalar_lea.vmem %s12, %s635
        %p637 = pneg %p337
        %p638 = pneg %p334
        %p639 = scmp.lt.s32.totalorder %s29, 1
        %s640 = scalar_select %p639, %s29, 1
        %s641 = smul.addr %s640, 16
        %s642 = smul.addr %s641, 4
        %s643 = scalar_lea.vmem %s13, %s642
        %p644 = pneg %p363
        %p645 = pneg %p360
        %p646 = scmp.lt.s32.totalorder %s29, 1
        %s647 = scalar_select %p646, %s29, 1
        %s648 = scalar_lea.vmem %s14, %s647
        %p649 = pneg %p389
        %p650 = pneg %p386
        %p651 = scmp.lt.s32.totalorder %s29, 1
        %s652 = scalar_select %p651, %s29, 1
        %s653 = scalar_lea.vmem %s15, %s652
        %p654 = pneg %p415
        %p655 = pneg %p412
        %p656 = scmp.lt.s32.totalorder %s29, 1
        %s657 = scalar_select %p656, %s29, 1
        %s658 = scalar_lea.vmem %s16, %s657
        %p659 = pneg %p441
        %p660 = pneg %p438
        %p661 = pneg %p462
        %p662 = pneg %p459
        %p663 = scmp.lt.s32.totalorder %s29, 1
        %s664 = scalar_select %p663, %s29, 1
        %s665 = smul.addr %s664, 4
        %s666 = smul.addr %s665, 4
        %s667 = scalar_lea.vmem %s5, %s666
        %p668 = scmp.lt.s32.totalorder %s29, 1
        %s669 = scalar_select %p668, %s29, 1
        %s670 = scalar_lea.vmem %s6, %s669
        %p671 = scmp.lt.s32.totalorder %s29, 1
        %s672 = scalar_select %p671, %s29, 1
        %s673 = smul.addr %s672, 4
        %s674 = smul.addr %s673, 4
        %s675 = scalar_lea.vmem %s7, %s674
        %p676 = scmp.lt.s32.totalorder %s29, 1
        %s677 = scalar_select %p676, %s29, 1
        %s678 = scalar_lea.vmem %s8, %s677
        %p679 = scmp.lt.s32.totalorder %s29, 1
        %s680 = scalar_select %p679, %s29, 1
        %s681 = scalar_lea.vmem %s9, %s680
        %p682 = scmp.lt.s32.totalorder %s29, 1
        %s683 = scalar_select %p682, %s29, 1
        %s684 = scalar_lea.vmem %s10, %s683
        %p685 = scmp.lt.s32.totalorder %s29, 1
        %s686 = scalar_select %p685, %s29, 1
        %s687 = smul.addr %s686, 4
        %s688 = smul.addr %s687, 4
        %s689 = scalar_lea.vmem %s11, %s688
        %p690 = scmp.lt.s32.totalorder %s29, 1
        %s691 = scalar_select %p690, %s29, 1
        %s692 = scalar_lea.vmem %s12, %s691
        %p693 = scmp.lt.s32.totalorder %s29, 1
        %s694 = scalar_select %p693, %s29, 1
        %s695 = smul.addr %s694, 16
        %s696 = smul.addr %s695, 4
        %s697 = scalar_lea.vmem %s13, %s696
        %p698 = scmp.lt.s32.totalorder %s29, 1
        %s699 = scalar_select %p698, %s29, 1
        %s700 = scalar_lea.vmem %s14, %s699
        %p701 = scmp.lt.s32.totalorder %s29, 1
        %s702 = scalar_select %p701, %s29, 1
        %s703 = scalar_lea.vmem %s15, %s702
        %p704 = scmp.lt.s32.totalorder %s29, 1
        %s705 = scalar_select %p704, %s29, 1
        %s706 = scalar_lea.vmem %s16, %s705
        %v708 = vld [vmem:[%s2] sm:$0xff]
        %v709 = vld [vmem:[%s2 + $0x8] sm:$0xff]
        %v710 = vld [vmem:[%s1] sm:$0xff]
        %v711 = vld [vmem:[%s1 + $0x8] sm:$0xff]
        %p712 = scmp.eq.s32.totalorder %s29, 0
        // Predicated region
        $region89: #{xlm_encoder_forward.1} parent=87 // pred_check
          %p713 = pneg %p712
        $region90: #{xlm_encoder_forward.1} parent=87 // pred_check_branch
          %715 = sbr.rel (%p713) target = $region92
        $region91: #{xlm_encoder_forward.1} parent=87 // pred_region
          %v716 = vld [vmem:[%s0] sm:$0xff]
          %v717 = vld [vmem:[%s0 + $0x8] sm:$0xff]
          %v718 = vld [vmem:[%s3] sm:$0x1]
          %v719 = vld [vmem:[%s4] sm:$0x1]
          %vm720 = vcmask 261120
          %v721 = vsel %vm720, %v716, 0.0
          %722 = vadd.xlane.f32.xlu0 %v721
          %v723 = vpop.xlane.xlu0 %722
          %v724 = vsel %vm720, %v717, 0.0
          %725 = vadd.xlane.f32.xlu0 %v724
          %v726 = vpop.xlane.xlu0 %725
          %v727 = vrcp.pop 32.0
          %v728 = vmul.f32 %v723, %v727
          %v729 = vmul.f32 %v726, %v727
          %v730 = vsub.f32 %v716, %v728
          %v731 = vsub.f32 %v717, %v729
          %v732 = vmul.f32 %v730, %v730
          %v733 = vmul.f32 %v731, %v731
          %v734 = vsel %vm720, %v732, 0.0
          %735 = vadd.xlane.f32.xlu0 %v734
          %v736 = vpop.xlane.xlu0 %735
          %v737 = vsel %vm720, %v733, 0.0
          %738 = vadd.xlane.f32.xlu0 %v737
          %v739 = vpop.xlane.xlu0 %738
          %v740 = vmul.f32 %v736, %v727
          %v741 = vmul.f32 %v739, %v727
          %v742 = vadd.f32 %v740, 1e-12
          %v743 = vadd.f32 %v741, 1e-12
          %v744 = vrsqrt.pop %v742
          %v745 = vrsqrt.pop %v743
          %v746 = vmul.f32 %v730, %v744
          %v747 = vmul.f32 %v731, %v745
          %v749 = vlaneseq
          %v750 = vshrl.u32 %v749, 7
          %v751 = vsub.s32 0, %v750
          %v752 = vrot.slane %v718, %v751
          %v754 = vmul.f32 %v746, %v752
          %v755 = vmul.f32 %v747, %v752
          %v757 = vlaneseq
          %v758 = vshrl.u32 %v757, 7
          %v759 = vsub.s32 0, %v758
          %v760 = vrot.slane %v719, %v759
          %v762 = vadd.f32 %v754, %v760
          %v763 = vadd.f32 %v755, %v760
          %765 = vset.pattern.permute.xlu0 0
          %766 = vperm.xlu0 %765, %v708
          %v767 = vpop.permute.xlu0 %766
          %770 = vset.pattern.permute.xlu0 0
          %771 = vperm.xlu0 %770, %v709
          %v772 = vpop.permute.xlu0 %771
          %v774 = vmul.f32 %v762, %v767
          %v775 = vmul.f32 %v763, %v772
          %776 = vst.msk [vmem:[#allocation2] sm:$0xff] %vm720, %v774
          %777 = vst.msk [vmem:[#allocation2 + $0x8] sm:$0xff] %vm720, %v775
        $region92: #{xlm_encoder_forward.1} parent=87 // pred_fallthru
          _
        %v778 = vld [vmem:[#allocation2] sm:$0xff]
        %v779 = vld [vmem:[#allocation2 + $0x8] sm:$0xff]
        %v780 = vld [vmem:[%s667] sm:$0xf]
        %v781 = vld [vmem:[%s667 + $0x4] sm:$0xf]
        %v782 = vld [vmem:[%s667 + $0x8] sm:$0xf]
        %v783 = vld [vmem:[%s667 + $0xc] sm:$0xf]
        %v784 = vpack.c.bf16 %v779, %v778
        %v785 = vld [vmem:[%s670] sm:$0x1]
        %v787 = vlaneseq
        %v788 = vshrl.u32 %v787, 7
        %v789 = vsub.s32 0, %v788
        %v790 = vrot.slane %v785, %v789
        %v796 = vunpack.c.l.b16 %v780
        %v797 = vunpack.c.l.b16 %v781
        %v798 = vunpack.c.l.b16 %v782
        %v799 = vunpack.c.l.b16 %v783
        %v800 = vpack.c.b16 %v797, %v796
        %v801 = vpack.c.b16 %v799, %v798
        %vm804 = vcmask 261120
        %v806 = vsel %vm804, %v784, 0
        %808 = vmatprep.subr.bf16.mxu0 0
        %809 = vmatpush1.bf16.msra.mxu0 0
        %810 = vmatprep.subr.bf16.mxu0 0
        %811 = vmatpush1.bf16.msra.mxu0 0
        %812 = vmatprep.subr.bf16.mxu0 0
        %813 = vmatpush1.bf16.msra.mxu0 0
        %814 = vmatprep.subr.bf16.mxu0 0
        %815 = vmatpush1.bf16.msra.mxu0 0
        %816 = vmatprep.subr.bf16.mxu0 0
        %817 = vmatpush1.bf16.msra.mxu0 0
        %818 = vmatprep.subr.bf16.mxu0 0
        %819 = vmatpush1.bf16.msra.mxu0 0
        %820 = vmatprep.subr.bf16.mxu0 0
        %821 = vmatpush1.bf16.msra.mxu0 %v801
        %822 = vmatprep.subr.bf16.mxu0 0
        %823 = vmatpush1.bf16.msra.mxu0 %v800
        %824 = vmatprep.subr.bf16.mxu0 0
        %825 = vmatpush2.bf16.msra.mxu0 0
        %826 = vmatprep.subr.bf16.mxu0 0
        %827 = vmatpush2.bf16.msra.mxu0 0
        %828 = vmatprep.subr.bf16.mxu0 0
        %829 = vmatpush2.bf16.msra.mxu0 0
        %830 = vmatprep.subr.bf16.mxu0 0
        %831 = vmatpush2.bf16.msra.mxu0 0
        %832 = vmatprep.subr.bf16.mxu0 0
        %833 = vmatpush2.bf16.msra.mxu0 0
        %834 = vmatprep.subr.bf16.mxu0 0
        %835 = vmatpush2.bf16.msra.mxu0 0
        %836 = vmatprep.subr.bf16.mxu0 0
        %837 = vmatpush2.bf16.msra.mxu0 0
        %838 = vmatprep.subr.bf16.mxu0 0
        %839 = vmatpush2.bf16.msra.mxu0 0
        %840 = vmatprep.mubr.bf16.mxu0 0
        %841 = vmatmul.mubr.bf16.gmra.mxu0 %v806
        %v842 = vpop.f32.mrf.mxu0
        %v843 = vadd.f32 %v790, %v842
        %v844 = vpop.f32.mrf.mxu0
        %v845 = vpop.f32.mrf.mxu0
        %v846 = vadd.f32 %v790, %v845
        %v847 = vpop.f32.mrf.mxu0
        %848 = vdwg.mxu0
        %v849 = vpack.c.bf16 %v846, %v843
        %v850 = vld [vmem:[%s675] sm:$0xf]
        %v851 = vld [vmem:[%s675 + $0x4] sm:$0xf]
        %v852 = vld [vmem:[%s675 + $0x8] sm:$0xf]
        %v853 = vld [vmem:[%s675 + $0xc] sm:$0xf]
        %855 = vrot.lane.b32.xlu0 %v849, 96
        %v856 = vpop.permute.xlu0 %855
        %vm857 = vcmask 64512
        %v859 = vsel %vm857, %v849, 0
        %v862 = vsel %vm857, %v856, 0
        %864 = vmatprep.subr.bf16.mxu0 0
        %865 = vmatpush1.bf16.xpose.msra.mxu0 0
        %866 = vmatprep.subr.bf16.mxu0 0
        %867 = vmatpush1.bf16.xpose.msra.mxu0 0
        %868 = vmatprep.subr.bf16.mxu0 0
        %869 = vmatpush1.bf16.xpose.msra.mxu0 0
        %870 = vmatprep.subr.bf16.mxu0 0
        %871 = vmatpush1.bf16.xpose.msra.mxu0 0
        %872 = vmatprep.subr.bf16.mxu0 0
        %873 = vmatpush1.bf16.xpose.msra.mxu0 0
        %874 = vmatprep.subr.bf16.mxu0 0
        %875 = vmatpush1.bf16.xpose.msra.mxu0 0
        %876 = vmatprep.subr.bf16.mxu0 0
        %877 = vmatpush1.bf16.xpose.msra.mxu0 0
        %878 = vmatprep.subr.bf16.mxu0 0
        %879 = vmatpush1.bf16.xpose.msra.mxu0 %v862
        %880 = vmatprep.subr.bf16.mxu0 0
        %881 = vmatpush2.bf16.xpose.msra.mxu0 0
        %882 = vmatprep.subr.bf16.mxu0 0
        %883 = vmatpush2.bf16.xpose.msra.mxu0 0
        %884 = vmatprep.subr.bf16.mxu0 0
        %885 = vmatpush2.bf16.xpose.msra.mxu0 0
        %886 = vmatprep.subr.bf16.mxu0 0
        %887 = vmatpush2.bf16.xpose.msra.mxu0 0
        %888 = vmatprep.subr.bf16.mxu0 0
        %889 = vmatpush2.bf16.xpose.msra.mxu0 0
        %890 = vmatprep.subr.bf16.mxu0 0
        %891 = vmatpush2.bf16.xpose.msra.mxu0 0
        %892 = vmatprep.subr.bf16.mxu0 0
        %893 = vmatpush2.bf16.xpose.msra.mxu0 0
        %894 = vmatprep.subr.bf16.mxu0 0
        %895 = vmatpush2.bf16.xpose.msra.mxu0 0
        %896 = vmatprep.mubr.bf16.mxu0 0
        %897 = vmatmul.mubr.bf16.gmra.mxu0 %v859
        %v898 = vpop.f32.mrf.mxu0
        %v899 = vadd.f32 0.0, %v898
        %v900 = vpop.f32.mrf.mxu0
        %v901 = vpop.f32.mrf.mxu0
        %v902 = vadd.f32 0.0, %v901
        %v903 = vpop.f32.mrf.mxu0
        %904 = vdwg.mxu0
        %v905 = vmul.f32 %v899, 0.35355338
        %v906 = vmul.f32 %v902, 0.35355338
        %v907 = vadd.f32 %v905, %v710
        %v908 = vadd.f32 %v906, %v711
        %vm909 = vcmask 130048
        %v910 = vsel %vm909, %v907, -inf
        %911 = vmax.xlane.f32.xlu0 %v910
        %v912 = vpop.xlane.xlu0 %911
        %v913 = vsel %vm909, %v908, -inf
        %914 = vmax.xlane.f32.xlu0 %v913
        %v915 = vpop.xlane.xlu0 %914
        %v916 = vsub.f32 %v907, %v912
        %v917 = vsub.f32 %v908, %v915
        %v918 = vmul.f32 %v916, 1.442695
        %v919 = vpow.pop %v918
        %v920 = vmul.f32 %v917, 1.442695
        %v921 = vpow.pop %v920
        %v922 = vsel %vm909, %v919, 0.0
        %923 = vadd.xlane.f32.xlu0 %v922
        %v924 = vpop.xlane.xlu0 %923
        %v925 = vsel %vm909, %v921, 0.0
        %926 = vadd.xlane.f32.xlu0 %v925
        %v927 = vpop.xlane.xlu0 %926
        %v928 = vrcp.pop %v924
        %v929 = vrcp.pop %v927
        %v930 = vmul.f32 %v919, %v928
        %v931 = vmul.f32 %v921, %v929
        %v932 = vpack.c.bf16 %v931, %v930
        %933 = vrot.lane.b32.xlu0 %v849, 64
        %v934 = vpop.permute.xlu0 %933
        %v937 = vsel %vm909, %v932, 0
        %939 = vmatprep.subr.bf16.mxu0 0
        %940 = vmatpush1.bf16.msra.mxu0 0
        %941 = vmatprep.subr.bf16.mxu0 0
        %942 = vmatpush1.bf16.msra.mxu0 0
        %943 = vmatprep.subr.bf16.mxu0 0
        %944 = vmatpush1.bf16.msra.mxu0 0
        %945 = vmatprep.subr.bf16.mxu0 0
        %946 = vmatpush1.bf16.msra.mxu0 0
        %947 = vmatprep.subr.bf16.mxu0 0
        %948 = vmatpush1.bf16.msra.mxu0 0
        %949 = vmatprep.subr.bf16.mxu0 0
        %950 = vmatpush1.bf16.msra.mxu0 0
        %951 = vmatprep.subr.bf16.mxu0 0
        %952 = vmatpush1.bf16.msra.mxu0 0
        %953 = vmatprep.subr.bf16.mxu0 0
        %954 = vmatpush1.bf16.msra.mxu0 %v934
        %955 = vmatprep.subr.bf16.mxu0 0
        %956 = vmatpush2.bf16.msra.mxu0 0
        %957 = vmatprep.subr.bf16.mxu0 0
        %958 = vmatpush2.bf16.msra.mxu0 0
        %959 = vmatprep.subr.bf16.mxu0 0
        %960 = vmatpush2.bf16.msra.mxu0 0
        %961 = vmatprep.subr.bf16.mxu0 0
        %962 = vmatpush2.bf16.msra.mxu0 0
        %963 = vmatprep.subr.bf16.mxu0 0
        %964 = vmatpush2.bf16.msra.mxu0 0
        %965 = vmatprep.subr.bf16.mxu0 0
        %966 = vmatpush2.bf16.msra.mxu0 0
        %967 = vmatprep.subr.bf16.mxu0 0
        %968 = vmatpush2.bf16.msra.mxu0 0
        %969 = vmatprep.subr.bf16.mxu0 0
        %970 = vmatpush2.bf16.msra.mxu0 0
        %971 = vmatprep.mubr.bf16.mxu0 0
        %972 = vmatmul.mubr.bf16.gmra.mxu0 %v937
        %v973 = vpop.f32.mrf.mxu0
        %v974 = vadd.f32 0.0, %v973
        %v975 = vpop.f32.mrf.mxu0
        %v976 = vpop.f32.mrf.mxu0
        %v977 = vadd.f32 0.0, %v976
        %v978 = vpop.f32.mrf.mxu0
        %979 = vdwg.mxu0
        %v980 = vpack.c.bf16 %v977, %v974
        %981 = vrot.lane.b32.xlu0 %v849, 120
        %v982 = vpop.permute.xlu0 %981
        %983 = vrot.lane.b32.xlu0 %v849, 88
        %v984 = vpop.permute.xlu0 %983
        %v986 = vsel %vm857, %v982, 0
        %v989 = vsel %vm857, %v984, 0
        %991 = vmatprep.subr.bf16.mxu0 0
        %992 = vmatpush1.bf16.xpose.msra.mxu0 0
        %993 = vmatprep.subr.bf16.mxu0 0
        %994 = vmatpush1.bf16.xpose.msra.mxu0 0
        %995 = vmatprep.subr.bf16.mxu0 0
        %996 = vmatpush1.bf16.xpose.msra.mxu0 0
        %997 = vmatprep.subr.bf16.mxu0 0
        %998 = vmatpush1.bf16.xpose.msra.mxu0 0
        %999 = vmatprep.subr.bf16.mxu0 0
        %1000 = vmatpush1.bf16.xpose.msra.mxu0 0
        %1001 = vmatprep.subr.bf16.mxu0 0
        %1002 = vmatpush1.bf16.xpose.msra.mxu0 0
        %1003 = vmatprep.subr.bf16.mxu0 0
        %1004 = vmatpush1.bf16.xpose.msra.mxu0 0
        %1005 = vmatprep.subr.bf16.mxu0 0
        %1006 = vmatpush1.bf16.xpose.msra.mxu0 %v989
        %1007 = vmatprep.subr.bf16.mxu0 0
        %1008 = vmatpush2.bf16.xpose.msra.mxu0 0
        %1009 = vmatprep.subr.bf16.mxu0 0
        %1010 = vmatpush2.bf16.xpose.msra.mxu0 0
        %1011 = vmatprep.subr.bf16.mxu0 0
        %1012 = vmatpush2.bf16.xpose.msra.mxu0 0
        %1013 = vmatprep.subr.bf16.mxu0 0
        %1014 = vmatpush2.bf16.xpose.msra.mxu0 0
        %1015 = vmatprep.subr.bf16.mxu0 0
        %1016 = vmatpush2.bf16.xpose.msra.mxu0 0
        %1017 = vmatprep.subr.bf16.mxu0 0
        %1018 = vmatpush2.bf16.xpose.msra.mxu0 0
        %1019 = vmatprep.subr.bf16.mxu0 0
        %1020 = vmatpush2.bf16.xpose.msra.mxu0 0
        %1021 = vmatprep.subr.bf16.mxu0 0
        %1022 = vmatpush2.bf16.xpose.msra.mxu0 0
        %1023 = vmatprep.mubr.bf16.mxu0 0
        %1024 = vmatmul.mubr.bf16.gmra.mxu0 %v986
        %v1025 = vpop.f32.mrf.mxu0
        %v1026 = vadd.f32 0.0, %v1025
        %v1027 = vpop.f32.mrf.mxu0
        %v1028 = vpop.f32.mrf.mxu0
        %v1029 = vadd.f32 0.0, %v1028
        %v1030 = vpop.f32.mrf.mxu0
        %1031 = vdwg.mxu0
        %v1032 = vmul.f32 %v1026, 0.35355338
        %v1033 = vmul.f32 %v1029, 0.35355338
        %v1034 = vadd.f32 %v1032, %v710
        %v1035 = vadd.f32 %v1033, %v711
        %v1036 = vsel %vm909, %v1034, -inf
        %1037 = vmax.xlane.f32.xlu0 %v1036
        %v1038 = vpop.xlane.xlu0 %1037
        %v1039 = vsel %vm909, %v1035, -inf
        %1040 = vmax.xlane.f32.xlu0 %v1039
        %v1041 = vpop.xlane.xlu0 %1040
        %v1042 = vsub.f32 %v1034, %v1038
        %v1043 = vsub.f32 %v1035, %v1041
        %v1044 = vmul.f32 %v1042, 1.442695
        %v1045 = vpow.pop %v1044
        %v1046 = vmul.f32 %v1043, 1.442695
        %v1047 = vpow.pop %v1046
        %v1048 = vsel %vm909, %v1045, 0.0
        %1049 = vadd.xlane.f32.xlu0 %v1048
        %v1050 = vpop.xlane.xlu0 %1049
        %v1051 = vsel %vm909, %v1047, 0.0
        %1052 = vadd.xlane.f32.xlu0 %v1051
        %v1053 = vpop.xlane.xlu0 %1052
        %v1054 = vrcp.pop %v1050
        %v1055 = vrcp.pop %v1053
        %v1056 = vmul.f32 %v1045, %v1054
        %v1057 = vmul.f32 %v1047, %v1055
        %v1058 = vpack.c.bf16 %v1057, %v1056
        %1059 = vrot.lane.b32.xlu0 %v849, 56
        %v1060 = vpop.permute.xlu0 %1059
        %v1063 = vsel %vm909, %v1058, 0
        %1065 = vmatprep.subr.bf16.mxu0 0
        %1066 = vmatpush1.bf16.msra.mxu0 0
        %1067 = vmatprep.subr.bf16.mxu0 0
        %1068 = vmatpush1.bf16.msra.mxu0 0
        %1069 = vmatprep.subr.bf16.mxu0 0
        %1070 = vmatpush1.bf16.msra.mxu0 0
        %1071 = vmatprep.subr.bf16.mxu0 0
        %1072 = vmatpush1.bf16.msra.mxu0 0
        %1073 = vmatprep.subr.bf16.mxu0 0
        %1074 = vmatpush1.bf16.msra.mxu0 0
        %1075 = vmatprep.subr.bf16.mxu0 0
        %1076 = vmatpush1.bf16.msra.mxu0 0
        %1077 = vmatprep.subr.bf16.mxu0 0
        %1078 = vmatpush1.bf16.msra.mxu0 0
        %1079 = vmatprep.subr.bf16.mxu0 0
        %1080 = vmatpush1.bf16.msra.mxu0 %v1060
        %1081 = vmatprep.subr.bf16.mxu0 0
        %1082 = vmatpush2.bf16.msra.mxu0 0
        %1083 = vmatprep.subr.bf16.mxu0 0
        %1084 = vmatpush2.bf16.msra.mxu0 0
        %1085 = vmatprep.subr.bf16.mxu0 0
        %1086 = vmatpush2.bf16.msra.mxu0 0
        %1087 = vmatprep.subr.bf16.mxu0 0
        %1088 = vmatpush2.bf16.msra.mxu0 0
        %1089 = vmatprep.subr.bf16.mxu0 0
        %1090 = vmatpush2.bf16.msra.mxu0 0
        %1091 = vmatprep.subr.bf16.mxu0 0
        %1092 = vmatpush2.bf16.msra.mxu0 0
        %1093 = vmatprep.subr.bf16.mxu0 0
        %1094 = vmatpush2.bf16.msra.mxu0 0
        %1095 = vmatprep.subr.bf16.mxu0 0
        %1096 = vmatpush2.bf16.msra.mxu0 0
        %1097 = vmatprep.mubr.bf16.mxu0 0
        %1098 = vmatmul.mubr.bf16.gmra.mxu0 %v1063
        %v1099 = vpop.f32.mrf.mxu0
        %v1100 = vadd.f32 0.0, %v1099
        %v1101 = vpop.f32.mrf.mxu0
        %v1102 = vpop.f32.mrf.mxu0
        %v1103 = vadd.f32 0.0, %v1102
        %v1104 = vpop.f32.mrf.mxu0
        %1105 = vdwg.mxu0
        %v1106 = vpack.c.bf16 %v1103, %v1100
        %v1108 = vsel %vm857, %v1106, 0
        %vm1110 = vcmask 1043456
        %v1112 = vsel %vm1110, %v851, 0
        %1114 = vmatprep.subr.bf16.mxu0 0
        %1115 = vmatpush1.bf16.msra.mxu0 0
        %1116 = vmatprep.subr.bf16.mxu0 0
        %1117 = vmatpush1.bf16.msra.mxu0 0
        %1118 = vmatprep.subr.bf16.mxu0 0
        %1119 = vmatpush1.bf16.msra.mxu0 0
        %1120 = vmatprep.subr.bf16.mxu0 0
        %1121 = vmatpush1.bf16.msra.mxu0 0
        %1122 = vmatprep.subr.bf16.mxu0 0
        %1123 = vmatpush1.bf16.msra.mxu0 0
        %1124 = vmatprep.subr.bf16.mxu0 0
        %1125 = vmatpush1.bf16.msra.mxu0 0
        %1126 = vmatprep.subr.bf16.mxu0 0
        %1127 = vmatpush1.bf16.msra.mxu0 0
        %1128 = vmatprep.subr.bf16.mxu0 0
        %1129 = vmatpush1.bf16.msra.mxu0 %v1112
        %1130 = vmatprep.subr.bf16.mxu0 0
        %1131 = vmatpush2.bf16.msra.mxu0 0
        %1132 = vmatprep.subr.bf16.mxu0 0
        %1133 = vmatpush2.bf16.msra.mxu0 0
        %1134 = vmatprep.subr.bf16.mxu0 0
        %1135 = vmatpush2.bf16.msra.mxu0 0
        %1136 = vmatprep.subr.bf16.mxu0 0
        %1137 = vmatpush2.bf16.msra.mxu0 0
        %1138 = vmatprep.subr.bf16.mxu0 0
        %1139 = vmatpush2.bf16.msra.mxu0 0
        %1140 = vmatprep.subr.bf16.mxu0 0
        %1141 = vmatpush2.bf16.msra.mxu0 0
        %1142 = vmatprep.subr.bf16.mxu0 0
        %1143 = vmatpush2.bf16.msra.mxu0 0
        %1144 = vmatprep.subr.bf16.mxu0 0
        %1145 = vmatpush2.bf16.msra.mxu0 0
        %1146 = vmatprep.mubr.bf16.mxu0 0
        %1147 = vmatmul.mubr.bf16.gmra.mxu0 %v1108
        %v1148 = vpop.f32.mrf.mxu0
        %v1149 = vadd.f32 0.0, %v1148
        %v1150 = vpop.f32.mrf.mxu0
        %v1151 = vpop.f32.mrf.mxu0
        %v1152 = vadd.f32 0.0, %v1151
        %v1153 = vpop.f32.mrf.mxu0
        %1154 = vdwg.mxu0
        %v1156 = vsel %vm857, %v980, 0
        %v1159 = vsel %vm1110, %v850, 0
        %1161 = vmatprep.subr.bf16.mxu0 0
        %1162 = vmatpush1.bf16.msra.mxu0 0
        %1163 = vmatprep.subr.bf16.mxu0 0
        %1164 = vmatpush1.bf16.msra.mxu0 0
        %1165 = vmatprep.subr.bf16.mxu0 0
        %1166 = vmatpush1.bf16.msra.mxu0 0
        %1167 = vmatprep.subr.bf16.mxu0 0
        %1168 = vmatpush1.bf16.msra.mxu0 0
        %1169 = vmatprep.subr.bf16.mxu0 0
        %1170 = vmatpush1.bf16.msra.mxu0 0
        %1171 = vmatprep.subr.bf16.mxu0 0
        %1172 = vmatpush1.bf16.msra.mxu0 0
        %1173 = vmatprep.subr.bf16.mxu0 0
        %1174 = vmatpush1.bf16.msra.mxu0 0
        %1175 = vmatprep.subr.bf16.mxu0 0
        %1176 = vmatpush1.bf16.msra.mxu0 %v1159
        %1177 = vmatprep.subr.bf16.mxu0 0
        %1178 = vmatpush2.bf16.msra.mxu0 0
        %1179 = vmatprep.subr.bf16.mxu0 0
        %1180 = vmatpush2.bf16.msra.mxu0 0
        %1181 = vmatprep.subr.bf16.mxu0 0
        %1182 = vmatpush2.bf16.msra.mxu0 0
        %1183 = vmatprep.subr.bf16.mxu0 0
        %1184 = vmatpush2.bf16.msra.mxu0 0
        %1185 = vmatprep.subr.bf16.mxu0 0
        %1186 = vmatpush2.bf16.msra.mxu0 0
        %1187 = vmatprep.subr.bf16.mxu0 0
        %1188 = vmatpush2.bf16.msra.mxu0 0
        %1189 = vmatprep.subr.bf16.mxu0 0
        %1190 = vmatpush2.bf16.msra.mxu0 0
        %1191 = vmatprep.subr.bf16.mxu0 0
        %1192 = vmatpush2.bf16.msra.mxu0 0
        %1193 = vmatprep.mubr.bf16.mxu0 0
        %1194 = vmatmul.mubr.bf16.gmra.mxu0 %v1156
        %v1195 = vpop.f32.mrf.mxu0
        %v1196 = vadd.f32 %v1149, %v1195
        %v1197 = vpop.f32.mrf.mxu0
        %v1198 = vpop.f32.mrf.mxu0
        %v1199 = vadd.f32 %v1152, %v1198
        %v1200 = vpop.f32.mrf.mxu0
        %1201 = vdwg.mxu0
        %1202 = vrot.lane.b32.xlu0 %v849, 112
        %v1203 = vpop.permute.xlu0 %1202
        %1204 = vrot.lane.b32.xlu0 %v849, 80
        %v1205 = vpop.permute.xlu0 %1204
        %v1207 = vsel %vm857, %v1203, 0
        %v1210 = vsel %vm857, %v1205, 0
        %1212 = vmatprep.subr.bf16.mxu0 0
        %1213 = vmatpush1.bf16.xpose.msra.mxu0 0
        %1214 = vmatprep.subr.bf16.mxu0 0
        %1215 = vmatpush1.bf16.xpose.msra.mxu0 0
        %1216 = vmatprep.subr.bf16.mxu0 0
        %1217 = vmatpush1.bf16.xpose.msra.mxu0 0
        %1218 = vmatprep.subr.bf16.mxu0 0
        %1219 = vmatpush1.bf16.xpose.msra.mxu0 0
        %1220 = vmatprep.subr.bf16.mxu0 0
        %1221 = vmatpush1.bf16.xpose.msra.mxu0 0
        %1222 = vmatprep.subr.bf16.mxu0 0
        %1223 = vmatpush1.bf16.xpose.msra.mxu0 0
        %1224 = vmatprep.subr.bf16.mxu0 0
        %1225 = vmatpush1.bf16.xpose.msra.mxu0 0
        %1226 = vmatprep.subr.bf16.mxu0 0
        %1227 = vmatpush1.bf16.xpose.msra.mxu0 %v1210
        %1228 = vmatprep.subr.bf16.mxu0 0
        %1229 = vmatpush2.bf16.xpose.msra.mxu0 0
        %1230 = vmatprep.subr.bf16.mxu0 0
        %1231 = vmatpush2.bf16.xpose.msra.mxu0 0
        %1232 = vmatprep.subr.bf16.mxu0 0
        %1233 = vmatpush2.bf16.xpose.msra.mxu0 0
        %1234 = vmatprep.subr.bf16.mxu0 0
        %1235 = vmatpush2.bf16.xpose.msra.mxu0 0
        %1236 = vmatprep.subr.bf16.mxu0 0
        %1237 = vmatpush2.bf16.xpose.msra.mxu0 0
        %1238 = vmatprep.subr.bf16.mxu0 0
        %1239 = vmatpush2.bf16.xpose.msra.mxu0 0
        %1240 = vmatprep.subr.bf16.mxu0 0
        %1241 = vmatpush2.bf16.xpose.msra.mxu0 0
        %1242 = vmatprep.subr.bf16.mxu0 0
        %1243 = vmatpush2.bf16.xpose.msra.mxu0 0
        %1244 = vmatprep.mubr.bf16.mxu0 0
        %1245 = vmatmul.mubr.bf16.gmra.mxu0 %v1207
        %v1246 = vpop.f32.mrf.mxu0
        %v1247 = vadd.f32 0.0, %v1246
        %v1248 = vpop.f32.mrf.mxu0
        %v1249 = vpop.f32.mrf.mxu0
        %v1250 = vadd.f32 0.0, %v1249
        %v1251 = vpop.f32.mrf.mxu0
        %1252 = vdwg.mxu0
        %v1253 = vmul.f32 %v1247, 0.35355338
        %v1254 = vmul.f32 %v1250, 0.35355338
        %v1255 = vadd.f32 %v1253, %v710
        %v1256 = vadd.f32 %v1254, %v711
        %v1257 = vsel %vm909, %v1255, -inf
        %1258 = vmax.xlane.f32.xlu0 %v1257
        %v1259 = vpop.xlane.xlu0 %1258
        %v1260 = vsel %vm909, %v1256, -inf
        %1261 = vmax.xlane.f32.xlu0 %v1260
        %v1262 = vpop.xlane.xlu0 %1261
        %v1263 = vsub.f32 %v1255, %v1259
        %v1264 = vsub.f32 %v1256, %v1262
        %v1265 = vmul.f32 %v1263, 1.442695
        %v1266 = vpow.pop %v1265
        %v1267 = vmul.f32 %v1264, 1.442695
        %v1268 = vpow.pop %v1267
        %v1269 = vsel %vm909, %v1266, 0.0
        %1270 = vadd.xlane.f32.xlu0 %v1269
        %v1271 = vpop.xlane.xlu0 %1270
        %v1272 = vsel %vm909, %v1268, 0.0
        %1273 = vadd.xlane.f32.xlu0 %v1272
        %v1274 = vpop.xlane.xlu0 %1273
        %v1275 = vrcp.pop %v1271
        %v1276 = vrcp.pop %v1274
        %v1277 = vmul.f32 %v1266, %v1275
        %v1278 = vmul.f32 %v1268, %v1276
        %v1279 = vpack.c.bf16 %v1278, %v1277
        %1280 = vrot.lane.b32.xlu0 %v849, 48
        %v1281 = vpop.permute.xlu0 %1280
        %v1284 = vsel %vm909, %v1279, 0
        %1286 = vmatprep.subr.bf16.mxu0 0
        %1287 = vmatpush1.bf16.msra.mxu0 0
        %1288 = vmatprep.subr.bf16.mxu0 0
        %1289 = vmatpush1.bf16.msra.mxu0 0
        %1290 = vmatprep.subr.bf16.mxu0 0
        %1291 = vmatpush1.bf16.msra.mxu0 0
        %1292 = vmatprep.subr.bf16.mxu0 0
        %1293 = vmatpush1.bf16.msra.mxu0 0
        %1294 = vmatprep.subr.bf16.mxu0 0
        %1295 = vmatpush1.bf16.msra.mxu0 0
        %1296 = vmatprep.subr.bf16.mxu0 0
        %1297 = vmatpush1.bf16.msra.mxu0 0
        %1298 = vmatprep.subr.bf16.mxu0 0
        %1299 = vmatpush1.bf16.msra.mxu0 0
        %1300 = vmatprep.subr.bf16.mxu0 0
        %1301 = vmatpush1.bf16.msra.mxu0 %v1281
        %1302 = vmatprep.subr.bf16.mxu0 0
        %1303 = vmatpush2.bf16.msra.mxu0 0
        %1304 = vmatprep.subr.bf16.mxu0 0
        %1305 = vmatpush2.bf16.msra.mxu0 0
        %1306 = vmatprep.subr.bf16.mxu0 0
        %1307 = vmatpush2.bf16.msra.mxu0 0
        %1308 = vmatprep.subr.bf16.mxu0 0
        %1309 = vmatpush2.bf16.msra.mxu0 0
        %1310 = vmatprep.subr.bf16.mxu0 0
        %1311 = vmatpush2.bf16.msra.mxu0 0
        %1312 = vmatprep.subr.bf16.mxu0 0
        %1313 = vmatpush2.bf16.msra.mxu0 0
        %1314 = vmatprep.subr.bf16.mxu0 0
        %1315 = vmatpush2.bf16.msra.mxu0 0
        %1316 = vmatprep.subr.bf16.mxu0 0
        %1317 = vmatpush2.bf16.msra.mxu0 0
        %1318 = vmatprep.mubr.bf16.mxu0 0
        %1319 = vmatmul.mubr.bf16.gmra.mxu0 %v1284
        %v1320 = vpop.f32.mrf.mxu0
        %v1321 = vadd.f32 0.0, %v1320
        %v1322 = vpop.f32.mrf.mxu0
        %v1323 = vpop.f32.mrf.mxu0
        %v1324 = vadd.f32 0.0, %v1323
        %v1325 = vpop.f32.mrf.mxu0
        %1326 = vdwg.mxu0
        %v1327 = vpack.c.bf16 %v1324, %v1321
        %v1329 = vsel %vm857, %v1327, 0
        %v1332 = vsel %vm1110, %v852, 0
        %1334 = vmatprep.subr.bf16.mxu0 0
        %1335 = vmatpush1.bf16.msra.mxu0 0
        %1336 = vmatprep.subr.bf16.mxu0 0
        %1337 = vmatpush1.bf16.msra.mxu0 0
        %1338 = vmatprep.subr.bf16.mxu0 0
        %1339 = vmatpush1.bf16.msra.mxu0 0
        %1340 = vmatprep.subr.bf16.mxu0 0
        %1341 = vmatpush1.bf16.msra.mxu0 0
        %1342 = vmatprep.subr.bf16.mxu0 0
        %1343 = vmatpush1.bf16.msra.mxu0 0
        %1344 = vmatprep.subr.bf16.mxu0 0
        %1345 = vmatpush1.bf16.msra.mxu0 0
        %1346 = vmatprep.subr.bf16.mxu0 0
        %1347 = vmatpush1.bf16.msra.mxu0 0
        %1348 = vmatprep.subr.bf16.mxu0 0
        %1349 = vmatpush1.bf16.msra.mxu0 %v1332
        %1350 = vmatprep.subr.bf16.mxu0 0
        %1351 = vmatpush2.bf16.msra.mxu0 0
        %1352 = vmatprep.subr.bf16.mxu0 0
        %1353 = vmatpush2.bf16.msra.mxu0 0
        %1354 = vmatprep.subr.bf16.mxu0 0
        %1355 = vmatpush2.bf16.msra.mxu0 0
        %1356 = vmatprep.subr.bf16.mxu0 0
        %1357 = vmatpush2.bf16.msra.mxu0 0
        %1358 = vmatprep.subr.bf16.mxu0 0
        %1359 = vmatpush2.bf16.msra.mxu0 0
        %1360 = vmatprep.subr.bf16.mxu0 0
        %1361 = vmatpush2.bf16.msra.mxu0 0
        %1362 = vmatprep.subr.bf16.mxu0 0
        %1363 = vmatpush2.bf16.msra.mxu0 0
        %1364 = vmatprep.subr.bf16.mxu0 0
        %1365 = vmatpush2.bf16.msra.mxu0 0
        %1366 = vmatprep.mubr.bf16.mxu0 0
        %1367 = vmatmul.mubr.bf16.gmra.mxu0 %v1329
        %v1368 = vpop.f32.mrf.mxu0
        %v1369 = vadd.f32 0.0, %v1368
        %v1370 = vpop.f32.mrf.mxu0
        %v1371 = vpop.f32.mrf.mxu0
        %v1372 = vadd.f32 0.0, %v1371
        %v1373 = vpop.f32.mrf.mxu0
        %1374 = vdwg.mxu0
        %v1375 = vadd.f32 %v1196, %v1369
        %v1376 = vadd.f32 %v1199, %v1372
        %1377 = vrot.lane.b32.xlu0 %v849, 104
        %v1378 = vpop.permute.xlu0 %1377
        %1379 = vrot.lane.b32.xlu0 %v849, 72
        %v1380 = vpop.permute.xlu0 %1379
        %v1382 = vsel %vm857, %v1378, 0
        %v1385 = vsel %vm857, %v1380, 0
        %1387 = vmatprep.subr.bf16.mxu0 0
        %1388 = vmatpush1.bf16.xpose.msra.mxu0 0
        %1389 = vmatprep.subr.bf16.mxu0 0
        %1390 = vmatpush1.bf16.xpose.msra.mxu0 0
        %1391 = vmatprep.subr.bf16.mxu0 0
        %1392 = vmatpush1.bf16.xpose.msra.mxu0 0
        %1393 = vmatprep.subr.bf16.mxu0 0
        %1394 = vmatpush1.bf16.xpose.msra.mxu0 0
        %1395 = vmatprep.subr.bf16.mxu0 0
        %1396 = vmatpush1.bf16.xpose.msra.mxu0 0
        %1397 = vmatprep.subr.bf16.mxu0 0
        %1398 = vmatpush1.bf16.xpose.msra.mxu0 0
        %1399 = vmatprep.subr.bf16.mxu0 0
        %1400 = vmatpush1.bf16.xpose.msra.mxu0 0
        %1401 = vmatprep.subr.bf16.mxu0 0
        %1402 = vmatpush1.bf16.xpose.msra.mxu0 %v1385
        %1403 = vmatprep.subr.bf16.mxu0 0
        %1404 = vmatpush2.bf16.xpose.msra.mxu0 0
        %1405 = vmatprep.subr.bf16.mxu0 0
        %1406 = vmatpush2.bf16.xpose.msra.mxu0 0
        %1407 = vmatprep.subr.bf16.mxu0 0
        %1408 = vmatpush2.bf16.xpose.msra.mxu0 0
        %1409 = vmatprep.subr.bf16.mxu0 0
        %1410 = vmatpush2.bf16.xpose.msra.mxu0 0
        %1411 = vmatprep.subr.bf16.mxu0 0
        %1412 = vmatpush2.bf16.xpose.msra.mxu0 0
        %1413 = vmatprep.subr.bf16.mxu0 0
        %1414 = vmatpush2.bf16.xpose.msra.mxu0 0
        %1415 = vmatprep.subr.bf16.mxu0 0
        %1416 = vmatpush2.bf16.xpose.msra.mxu0 0
        %1417 = vmatprep.subr.bf16.mxu0 0
        %1418 = vmatpush2.bf16.xpose.msra.mxu0 0
        %1419 = vmatprep.mubr.bf16.mxu0 0
        %1420 = vmatmul.mubr.bf16.gmra.mxu0 %v1382
        %v1421 = vpop.f32.mrf.mxu0
        %v1422 = vadd.f32 0.0, %v1421
        %v1423 = vpop.f32.mrf.mxu0
        %v1424 = vpop.f32.mrf.mxu0
        %v1425 = vadd.f32 0.0, %v1424
        %v1426 = vpop.f32.mrf.mxu0
        %1427 = vdwg.mxu0
        %v1428 = vmul.f32 %v1422, 0.35355338
        %v1429 = vmul.f32 %v1425, 0.35355338
        %v1430 = vadd.f32 %v1428, %v710
        %v1431 = vadd.f32 %v1429, %v711
        %v1432 = vsel %vm909, %v1430, -inf
        %1433 = vmax.xlane.f32.xlu0 %v1432
        %v1434 = vpop.xlane.xlu0 %1433
        %v1435 = vsel %vm909, %v1431, -inf
        %1436 = vmax.xlane.f32.xlu0 %v1435
        %v1437 = vpop.xlane.xlu0 %1436
        %v1438 = vsub.f32 %v1430, %v1434
        %v1439 = vsub.f32 %v1431, %v1437
        %v1440 = vmul.f32 %v1438, 1.442695
        %v1441 = vpow.pop %v1440
        %v1442 = vmul.f32 %v1439, 1.442695
        %v1443 = vpow.pop %v1442
        %v1444 = vsel %vm909, %v1441, 0.0
        %1445 = vadd.xlane.f32.xlu0 %v1444
        %v1446 = vpop.xlane.xlu0 %1445
        %v1447 = vsel %vm909, %v1443, 0.0
        %1448 = vadd.xlane.f32.xlu0 %v1447
        %v1449 = vpop.xlane.xlu0 %1448
        %v1450 = vrcp.pop %v1446
        %v1451 = vrcp.pop %v1449
        %v1452 = vmul.f32 %v1441, %v1450
        %v1453 = vmul.f32 %v1443, %v1451
        %v1454 = vpack.c.bf16 %v1453, %v1452
        %1455 = vrot.lane.b32.xlu0 %v849, 40
        %v1456 = vpop.permute.xlu0 %1455
        %v1459 = vsel %vm909, %v1454, 0
        %1461 = vmatprep.subr.bf16.mxu0 0
        %1462 = vmatpush1.bf16.msra.mxu0 0
        %1463 = vmatprep.subr.bf16.mxu0 0
        %1464 = vmatpush1.bf16.msra.mxu0 0
        %1465 = vmatprep.subr.bf16.mxu0 0
        %1466 = vmatpush1.bf16.msra.mxu0 0
        %1467 = vmatprep.subr.bf16.mxu0 0
        %1468 = vmatpush1.bf16.msra.mxu0 0
        %1469 = vmatprep.subr.bf16.mxu0 0
        %1470 = vmatpush1.bf16.msra.mxu0 0
        %1471 = vmatprep.subr.bf16.mxu0 0
        %1472 = vmatpush1.bf16.msra.mxu0 0
        %1473 = vmatprep.subr.bf16.mxu0 0
        %1474 = vmatpush1.bf16.msra.mxu0 0
        %1475 = vmatprep.subr.bf16.mxu0 0
        %1476 = vmatpush1.bf16.msra.mxu0 %v1456
        %1477 = vmatprep.subr.bf16.mxu0 0
        %1478 = vmatpush2.bf16.msra.mxu0 0
        %1479 = vmatprep.subr.bf16.mxu0 0
        %1480 = vmatpush2.bf16.msra.mxu0 0
        %1481 = vmatprep.subr.bf16.mxu0 0
        %1482 = vmatpush2.bf16.msra.mxu0 0
        %1483 = vmatprep.subr.bf16.mxu0 0
        %1484 = vmatpush2.bf16.msra.mxu0 0
        %1485 = vmatprep.subr.bf16.mxu0 0
        %1486 = vmatpush2.bf16.msra.mxu0 0
        %1487 = vmatprep.subr.bf16.mxu0 0
        %1488 = vmatpush2.bf16.msra.mxu0 0
        %1489 = vmatprep.subr.bf16.mxu0 0
        %1490 = vmatpush2.bf16.msra.mxu0 0
        %1491 = vmatprep.subr.bf16.mxu0 0
        %1492 = vmatpush2.bf16.msra.mxu0 0
        %1493 = vmatprep.mubr.bf16.mxu0 0
        %1494 = vmatmul.mubr.bf16.gmra.mxu0 %v1459
        %v1495 = vpop.f32.mrf.mxu0
        %v1496 = vadd.f32 0.0, %v1495
        %v1497 = vpop.f32.mrf.mxu0
        %v1498 = vpop.f32.mrf.mxu0
        %v1499 = vadd.f32 0.0, %v1498
        %v1500 = vpop.f32.mrf.mxu0
        %1501 = vdwg.mxu0
        %v1502 = vpack.c.bf16 %v1499, %v1496
        %v1504 = vsel %vm857, %v1502, 0
        %v1507 = vsel %vm1110, %v853, 0
        %1509 = vmatprep.subr.bf16.mxu0 0
        %1510 = vmatpush1.bf16.msra.mxu0 0
        %1511 = vmatprep.subr.bf16.mxu0 0
        %1512 = vmatpush1.bf16.msra.mxu0 0
        %1513 = vmatprep.subr.bf16.mxu0 0
        %1514 = vmatpush1.bf16.msra.mxu0 0
        %1515 = vmatprep.subr.bf16.mxu0 0
        %1516 = vmatpush1.bf16.msra.mxu0 0
        %1517 = vmatprep.subr.bf16.mxu0 0
        %1518 = vmatpush1.bf16.msra.mxu0 0
        %1519 = vmatprep.subr.bf16.mxu0 0
        %1520 = vmatpush1.bf16.msra.mxu0 0
        %1521 = vmatprep.subr.bf16.mxu0 0
        %1522 = vmatpush1.bf16.msra.mxu0 0
        %1523 = vmatprep.subr.bf16.mxu0 0
        %1524 = vmatpush1.bf16.msra.mxu0 %v1507
        %1525 = vmatprep.subr.bf16.mxu0 0
        %1526 = vmatpush2.bf16.msra.mxu0 0
        %1527 = vmatprep.subr.bf16.mxu0 0
        %1528 = vmatpush2.bf16.msra.mxu0 0
        %1529 = vmatprep.subr.bf16.mxu0 0
        %1530 = vmatpush2.bf16.msra.mxu0 0
        %1531 = vmatprep.subr.bf16.mxu0 0
        %1532 = vmatpush2.bf16.msra.mxu0 0
        %1533 = vmatprep.subr.bf16.mxu0 0
        %1534 = vmatpush2.bf16.msra.mxu0 0
        %1535 = vmatprep.subr.bf16.mxu0 0
        %1536 = vmatpush2.bf16.msra.mxu0 0
        %1537 = vmatprep.subr.bf16.mxu0 0
        %1538 = vmatpush2.bf16.msra.mxu0 0
        %1539 = vmatprep.subr.bf16.mxu0 0
        %1540 = vmatpush2.bf16.msra.mxu0 0
        %1541 = vmatprep.mubr.bf16.mxu0 0
        %1542 = vmatmul.mubr.bf16.gmra.mxu0 %v1504
        %v1543 = vpop.f32.mrf.mxu0
        %v1544 = vadd.f32 0.0, %v1543
        %v1545 = vpop.f32.mrf.mxu0
        %v1546 = vpop.f32.mrf.mxu0
        %v1547 = vadd.f32 0.0, %v1546
        %v1548 = vpop.f32.mrf.mxu0
        %1549 = vdwg.mxu0
        %v1550 = vadd.f32 %v1375, %v1544
        %v1551 = vadd.f32 %v1376, %v1547
        %v1552 = vld [vmem:[%s678] sm:$0x1]
        %v1554 = vlaneseq
        %v1555 = vshrl.u32 %v1554, 7
        %v1556 = vsub.s32 0, %v1555
        %v1557 = vrot.slane %v1552, %v1556
        %v1559 = vadd.f32 %v1550, %v1557
        %v1560 = vadd.f32 %v1551, %v1557
        %v1561 = vadd.f32 %v778, %v1559
        %v1562 = vadd.f32 %v779, %v1560
        %v1563 = vld [vmem:[%s681] sm:$0x1]
        %v1564 = vld [vmem:[%s684] sm:$0x1]
        %v1565 = vsel %vm804, %v1561, 0.0
        %1566 = vadd.xlane.f32.xlu0 %v1565
        %v1567 = vpop.xlane.xlu0 %1566
        %v1568 = vsel %vm804, %v1562, 0.0
        %1569 = vadd.xlane.f32.xlu0 %v1568
        %v1570 = vpop.xlane.xlu0 %1569
        %v1571 = vrcp.pop 32.0
        %v1572 = vmul.f32 %v1567, %v1571
        %v1573 = vmul.f32 %v1570, %v1571
        %v1574 = vsub.f32 %v1561, %v1572
        %v1575 = vsub.f32 %v1562, %v1573
        %v1576 = vmul.f32 %v1574, %v1574
        %v1577 = vmul.f32 %v1575, %v1575
        %v1578 = vsel %vm804, %v1576, 0.0
        %1579 = vadd.xlane.f32.xlu0 %v1578
        %v1580 = vpop.xlane.xlu0 %1579
        %v1581 = vsel %vm804, %v1577, 0.0
        %1582 = vadd.xlane.f32.xlu0 %v1581
        %v1583 = vpop.xlane.xlu0 %1582
        %v1584 = vmul.f32 %v1580, %v1571
        %v1585 = vmul.f32 %v1583, %v1571
        %v1586 = vadd.f32 %v1584, 1e-12
        %v1587 = vadd.f32 %v1585, 1e-12
        %v1588 = vrsqrt.pop %v1586
        %v1589 = vrsqrt.pop %v1587
        %v1590 = vmul.f32 %v1574, %v1588
        %v1591 = vmul.f32 %v1575, %v1589
        %v1593 = vlaneseq
        %v1594 = vshrl.u32 %v1593, 7
        %v1595 = vsub.s32 0, %v1594
        %v1596 = vrot.slane %v1563, %v1595
        %v1598 = vmul.f32 %v1590, %v1596
        %v1599 = vmul.f32 %v1591, %v1596
        %v1601 = vlaneseq
        %v1602 = vshrl.u32 %v1601, 7
        %v1603 = vsub.s32 0, %v1602
        %v1604 = vrot.slane %v1564, %v1603
        %v1606 = vadd.f32 %v1598, %v1604
        %v1607 = vadd.f32 %v1599, %v1604
        %v1608 = vld [vmem:[%s689] sm:$0xf]
        %v1609 = vld [vmem:[%s689 + $0x4] sm:$0xf]
        %v1610 = vld [vmem:[%s689 + $0x8] sm:$0xf]
        %v1611 = vld [vmem:[%s689 + $0xc] sm:$0xf]
        %v1612 = vpack.c.bf16 %v1607, %v1606
        %v1613 = vld [vmem:[%s692] sm:$0x1]
        %v1615 = vlaneseq
        %v1616 = vshrl.u32 %v1615, 7
        %v1617 = vsub.s32 0, %v1616
        %v1618 = vrot.slane %v1613, %v1617
        %v1624 = vunpack.c.l.b16 %v1608
        %v1625 = vunpack.c.l.b16 %v1609
        %v1626 = vunpack.c.l.b16 %v1610
        %v1627 = vunpack.c.l.b16 %v1611
        %v1628 = vpack.c.b16 %v1625, %v1624
        %v1629 = vpack.c.b16 %v1627, %v1626
        %v1633 = vsel %vm804, %v1612, 0
        %1635 = vmatprep.subr.bf16.mxu0 0
        %1636 = vmatpush1.bf16.msra.mxu0 0
        %1637 = vmatprep.subr.bf16.mxu0 0
        %1638 = vmatpush1.bf16.msra.mxu0 0
        %1639 = vmatprep.subr.bf16.mxu0 0
        %1640 = vmatpush1.bf16.msra.mxu0 0
        %1641 = vmatprep.subr.bf16.mxu0 0
        %1642 = vmatpush1.bf16.msra.mxu0 0
        %1643 = vmatprep.subr.bf16.mxu0 0
        %1644 = vmatpush1.bf16.msra.mxu0 0
        %1645 = vmatprep.subr.bf16.mxu0 0
        %1646 = vmatpush1.bf16.msra.mxu0 0
        %1647 = vmatprep.subr.bf16.mxu0 0
        %1648 = vmatpush1.bf16.msra.mxu0 %v1629
        %1649 = vmatprep.subr.bf16.mxu0 0
        %1650 = vmatpush1.bf16.msra.mxu0 %v1628
        %1651 = vmatprep.subr.bf16.mxu0 0
        %1652 = vmatpush2.bf16.msra.mxu0 0
        %1653 = vmatprep.subr.bf16.mxu0 0
        %1654 = vmatpush2.bf16.msra.mxu0 0
        %1655 = vmatprep.subr.bf16.mxu0 0
        %1656 = vmatpush2.bf16.msra.mxu0 0
        %1657 = vmatprep.subr.bf16.mxu0 0
        %1658 = vmatpush2.bf16.msra.mxu0 0
        %1659 = vmatprep.subr.bf16.mxu0 0
        %1660 = vmatpush2.bf16.msra.mxu0 0
        %1661 = vmatprep.subr.bf16.mxu0 0
        %1662 = vmatpush2.bf16.msra.mxu0 0
        %1663 = vmatprep.subr.bf16.mxu0 0
        %1664 = vmatpush2.bf16.msra.mxu0 0
        %1665 = vmatprep.subr.bf16.mxu0 0
        %1666 = vmatpush2.bf16.msra.mxu0 0
        %1667 = vmatprep.mubr.bf16.mxu0 0
        %1668 = vmatmul.mubr.bf16.gmra.mxu0 %v1633
        %v1669 = vpop.f32.mrf.mxu0
        %v1670 = vadd.f32 %v1618, %v1669
        %v1671 = vpop.f32.mrf.mxu0
        %v1672 = vpop.f32.mrf.mxu0
        %v1673 = vadd.f32 %v1618, %v1672
        %v1674 = vpop.f32.mrf.mxu0
        %1675 = vdwg.mxu0
        %v1676 = vmul.f32 %v1670, 0.5
        %v1677 = vmul.f32 %v1673, 0.5
        %v1678 = vmul.f32 %v1670, 0.044715
        %v1679 = vmul.f32 %v1673, 0.044715
        %v1680 = vmul.f32 %v1678, %v1670
        %v1681 = vmul.f32 %v1679, %v1673
        %v1682 = vmul.f32 %v1680, %v1670
        %v1683 = vmul.f32 %v1681, %v1673
        %v1684 = vadd.f32 %v1670, %v1682
        %v1685 = vadd.f32 %v1673, %v1683
        %v1686 = vmul.f32 %v1684, 0.7978846
        %v1687 = vmul.f32 %v1685, 0.7978846
        %v1688 = vtanh.pop %v1686
        %v1689 = vtanh.pop %v1687
        %v1690 = vadd.f32 %v1688, 1.0
        %v1691 = vadd.f32 %v1689, 1.0
        %v1692 = vmul.f32 %v1676, %v1690
        %v1693 = vmul.f32 %v1677, %v1691
        %v1694 = vld [vmem:[%s697] sm:$0xf]
        %v1695 = vld [vmem:[%s697 + $0x4] sm:$0xf]
        %v1696 = vld [vmem:[%s697 + $0x8] sm:$0xf]
        %v1697 = vld [vmem:[%s697 + $0xc] sm:$0xf]
        %v1698 = vld [vmem:[%s697 + $0x10] sm:$0xf]
        %v1699 = vld [vmem:[%s697 + $0x14] sm:$0xf]
        %v1700 = vld [vmem:[%s697 + $0x18] sm:$0xf]
        %v1701 = vld [vmem:[%s697 + $0x1c] sm:$0xf]
        %v1702 = vld [vmem:[%s697 + $0x20] sm:$0xf]
        %v1703 = vld [vmem:[%s697 + $0x24] sm:$0xf]
        %v1704 = vld [vmem:[%s697 + $0x28] sm:$0xf]
        %v1705 = vld [vmem:[%s697 + $0x2c] sm:$0xf]
        %v1706 = vld [vmem:[%s697 + $0x30] sm:$0xf]
        %v1707 = vld [vmem:[%s697 + $0x34] sm:$0xf]
        %v1708 = vld [vmem:[%s697 + $0x38] sm:$0xf]
        %v1709 = vld [vmem:[%s697 + $0x3c] sm:$0xf]
        %v1710 = vpack.c.bf16 %v1693, %v1692
        %v1711 = vld [vmem:[%s700] sm:$0x1]
        %v1713 = vlaneseq
        %v1714 = vshrl.u32 %v1713, 7
        %v1715 = vsub.s32 0, %v1714
        %v1716 = vrot.slane %v1711, %v1715
        %v1734 = vunpack.c.l.b16 %v1694
        %v1735 = vunpack.c.l.b16 %v1695
        %v1736 = vunpack.c.l.b16 %v1696
        %v1737 = vunpack.c.l.b16 %v1697
        %v1738 = vunpack.c.l.b16 %v1698
        %v1739 = vunpack.c.l.b16 %v1699
        %v1740 = vunpack.c.l.b16 %v1700
        %v1741 = vunpack.c.l.b16 %v1701
        %v1742 = vunpack.c.l.b16 %v1702
        %v1743 = vunpack.c.l.b16 %v1703
        %v1744 = vunpack.c.l.b16 %v1704
        %v1745 = vunpack.c.l.b16 %v1705
        %v1746 = vunpack.c.l.b16 %v1706
        %v1747 = vunpack.c.l.b16 %v1707
        %v1748 = vunpack.c.l.b16 %v1708
        %v1749 = vunpack.c.l.b16 %v1709
        %v1750 = vpack.c.b16 %v1735, %v1734
        %v1751 = vpack.c.b16 %v1737, %v1736
        %v1752 = vpack.c.b16 %v1739, %v1738
        %v1753 = vpack.c.b16 %v1741, %v1740
        %v1754 = vpack.c.b16 %v1743, %v1742
        %v1755 = vpack.c.b16 %v1745, %v1744
        %v1756 = vpack.c.b16 %v1747, %v1746
        %v1757 = vpack.c.b16 %v1749, %v1748
        %1766 = vmatprep.subr.bf16.mxu0 0
        %1767 = vmatpush1.bf16.msra.mxu0 %v1757
        %1768 = vmatprep.subr.bf16.mxu0 0
        %1769 = vmatpush1.bf16.msra.mxu0 %v1756
        %1770 = vmatprep.subr.bf16.mxu0 0
        %1771 = vmatpush1.bf16.msra.mxu0 %v1755
        %1772 = vmatprep.subr.bf16.mxu0 0
        %1773 = vmatpush1.bf16.msra.mxu0 %v1754
        %1774 = vmatprep.subr.bf16.mxu0 0
        %1775 = vmatpush1.bf16.msra.mxu0 %v1753
        %1776 = vmatprep.subr.bf16.mxu0 0
        %1777 = vmatpush1.bf16.msra.mxu0 %v1752
        %1778 = vmatprep.subr.bf16.mxu0 0
        %1779 = vmatpush1.bf16.msra.mxu0 %v1751
        %1780 = vmatprep.subr.bf16.mxu0 0
        %1781 = vmatpush1.bf16.msra.mxu0 %v1750
        %1782 = vmatprep.subr.bf16.mxu0 0
        %1783 = vmatpush2.bf16.msra.mxu0 0
        %1784 = vmatprep.subr.bf16.mxu0 0
        %1785 = vmatpush2.bf16.msra.mxu0 0
        %1786 = vmatprep.subr.bf16.mxu0 0
        %1787 = vmatpush2.bf16.msra.mxu0 0
        %1788 = vmatprep.subr.bf16.mxu0 0
        %1789 = vmatpush2.bf16.msra.mxu0 0
        %1790 = vmatprep.subr.bf16.mxu0 0
        %1791 = vmatpush2.bf16.msra.mxu0 0
        %1792 = vmatprep.subr.bf16.mxu0 0
        %1793 = vmatpush2.bf16.msra.mxu0 0
        %1794 = vmatprep.subr.bf16.mxu0 0
        %1795 = vmatpush2.bf16.msra.mxu0 0
        %1796 = vmatprep.subr.bf16.mxu0 0
        %1797 = vmatpush2.bf16.msra.mxu0 0
        %1798 = vmatprep.mubr.bf16.mxu0 0
        %1799 = vmatmul.mubr.bf16.gmra.mxu0 %v1710
        %v1800 = vpop.f32.mrf.mxu0
        %v1801 = vadd.f32 %v1716, %v1800
        %v1802 = vpop.f32.mrf.mxu0
        %v1803 = vpop.f32.mrf.mxu0
        %v1804 = vadd.f32 %v1716, %v1803
        %v1805 = vpop.f32.mrf.mxu0
        %1806 = vdwg.mxu0
        %v1807 = vadd.f32 %v1606, %v1801
        %v1808 = vadd.f32 %v1607, %v1804
        %v1809 = vld [vmem:[%s703] sm:$0x1]
        %v1810 = vld [vmem:[%s706] sm:$0x1]
        %v1811 = vsel %vm804, %v1807, 0.0
        %1812 = vadd.xlane.f32.xlu0 %v1811
        %v1813 = vpop.xlane.xlu0 %1812
        %v1814 = vsel %vm804, %v1808, 0.0
        %1815 = vadd.xlane.f32.xlu0 %v1814
        %v1816 = vpop.xlane.xlu0 %1815
        %v1817 = vmul.f32 %v1813, %v1571
        %v1818 = vmul.f32 %v1816, %v1571
        %v1819 = vsub.f32 %v1807, %v1817
        %v1820 = vsub.f32 %v1808, %v1818
        %v1821 = vmul.f32 %v1819, %v1819
        %v1822 = vmul.f32 %v1820, %v1820
        %v1823 = vsel %vm804, %v1821, 0.0
        %1824 = vadd.xlane.f32.xlu0 %v1823
        %v1825 = vpop.xlane.xlu0 %1824
        %v1826 = vsel %vm804, %v1822, 0.0
        %1827 = vadd.xlane.f32.xlu0 %v1826
        %v1828 = vpop.xlane.xlu0 %1827
        %v1829 = vmul.f32 %v1825, %v1571
        %v1830 = vmul.f32 %v1828, %v1571
        %v1831 = vadd.f32 %v1829, 1e-12
        %v1832 = vadd.f32 %v1830, 1e-12
        %v1833 = vrsqrt.pop %v1831
        %v1834 = vrsqrt.pop %v1832
        %v1835 = vmul.f32 %v1819, %v1833
        %v1836 = vmul.f32 %v1820, %v1834
        %v1838 = vlaneseq
        %v1839 = vshrl.u32 %v1838, 7
        %v1840 = vsub.s32 0, %v1839
        %v1841 = vrot.slane %v1809, %v1840
        %v1843 = vmul.f32 %v1835, %v1841
        %v1844 = vmul.f32 %v1836, %v1841
        %v1846 = vlaneseq
        %v1847 = vshrl.u32 %v1846, 7
        %v1848 = vsub.s32 0, %v1847
        %v1849 = vrot.slane %v1810, %v1848
        %v1851 = vadd.f32 %v1843, %v1849
        %v1852 = vadd.f32 %v1844, %v1849
        %1854 = vset.pattern.permute.xlu0 0
        %1855 = vperm.xlu0 %1854, %v708
        %v1856 = vpop.permute.xlu0 %1855
        %1859 = vset.pattern.permute.xlu0 0
        %1860 = vperm.xlu0 %1859, %v709
        %v1861 = vpop.permute.xlu0 %1860
        %v1863 = vmul.f32 %v1851, %v1856
        %v1864 = vmul.f32 %v1852, %v1861
        %1865 = vst.msk [vmem:[#allocation2] sm:$0xff] %vm804, %v1863
        %1866 = vst.msk [vmem:[#allocation2 + $0x8] sm:$0xff] %vm804, %v1864
        %1867 = vst.msk [vmem:[#allocation3] sm:$0xff] %vm804, %v1863
        %1868 = vst.msk [vmem:[#allocation3 + $0x8] sm:$0xff] %vm804, %v1864
        // Predicated region
        $region93: #{xlm_encoder_forward.1} parent=87 // pred_check
          %p1869 = pneg %p459
        $region94: #{xlm_encoder_forward.1} parent=87 // pred_check_branch
          %1871 = sbr.rel (%p1869) target = $region96
        $region95: #{xlm_encoder_forward.1} parent=87 // pred_region
          %s1873 = ssub.s32 256, 256
          %1874 = vsyncadd [#allocation4], %s1873
          %s1875 = sshll.u32 [#allocation3], 4
          %s1876 = int_to_ptr.vmem [resolvable:$true] %s1875
          %1881 = dma.vmem_to_hbm [thread:$0]  %s1876, 256, %s17, [#allocation4], 128, 128, 8
        $region96: #{xlm_encoder_forward.1} parent=87 // pred_fallthru
          _
        // Predicated region
        $region97: #{xlm_encoder_forward.1} parent=87 // pred_check
          %p1882 = pneg %p459
        $region98: #{xlm_encoder_forward.1} parent=87 // pred_check_branch
          %1884 = sbr.rel (%p1882) target = $region100
        $region99: #{xlm_encoder_forward.1} parent=87 // pred_region
          %1885 = dma.done [#allocation4], 256
        $region100: #{xlm_encoder_forward.1} parent=87 // pred_fallthru
          _
      $region88: #{xlm_encoder_forward.1} parent=5 // pred_fallthru
        _
      %p1886 = scmp.le.s32.totalorder 2, %s24
      // Predicated region
      $region101: #{xlm_encoder_forward.1} parent=5 // pred_check
        %p1887 = pneg %p1886
      $region102: #{xlm_encoder_forward.1} parent=5 // pred_check_branch
        %1889 = sbr.rel (%p1887) target = $region104
      $region103: #{xlm_encoder_forward.1} parent=5 // pred_region
        %s1890 = ssub.s32 %s24, 2
      $region104: #{xlm_encoder_forward.1} parent=5 // pred_fallthru
        _
    $region6: #{xlm_encoder_forward.1} parent=1 // loop_footer
      %s28 = sadd.s32 1, %s24
    $region7: #{xlm_encoder_forward.1} parent=1 // loop_footer_branch
      %23 = sbr.rel target = $region3
    $region8: #{xlm_encoder_forward.1} parent=1 // loop_exit
      _
    %1891 = vsyncpa [#allocation4], 1
    %s1892 = scalar_lea.sflag [#allocation4], 1
    %1893 = vsyncpa %s1892, 1

</llo_original>
